<compile_context>
chip_gen: v7x
topology: tpu7x:2x2x1
jax: 0.10.0
libtpu: 0.0.40
codegen_flags: <defaults>
</compile_context>

<pallas_src>
import functools

import jax
import jax.numpy as jnp
from jax.experimental import pallas as pl
from jax.experimental.pallas import tpu as pltpu


def _rnn_rollout_kernel(
    # inputs
    obs_ref,    # (T, tb, I)   whole rollout for this batch chunk (resident)
    h0_ref,     # (tb, H)      initial hidden state for this chunk
    w1_ref,     # (I, H)       fc1 weight, (in, out)
    b1_ref,     # (1, H)       fc1 bias
    wg_ref,     # (2H, 4H)     fused GRU weight, cols [r | z | gi_n | gh_n]
    bg_ref,     # (1, 4H)      [b_ir+b_hr | b_iz+b_hz | b_in | b_hn]
    w2_ref,     # (H, A)       fc2 weight, (in, out)
    b2_ref,     # (1, A)       fc2 bias
    # outputs
    q_ref,      # (T, tb, A)   whole q rollout for this chunk (resident)
    hout_ref,   # (tb, H)      final hidden state
):
    T = obs_ref.shape[0]
    H = hout_ref.shape[-1]
    cdt = w1_ref.dtype                       # MXU input dtype (f32 or bf16)

    # Weights are tiny (< a few KB); read once and let the scheduler keep them
    # live in vregs across the fully-unrolled time loop.
    w1 = w1_ref[...]
    b1 = b1_ref[...]
    wg = wg_ref[...]
    bg = bg_ref[...]
    w2 = w2_ref[...]
    b2 = b2_ref[...]

    h = h0_ref[...].astype(jnp.float32)      # (tb, H) carried across steps

    # T is static: a fully-unrolled loop removes all per-step loop/grid
    # overhead and supports the q_ref[t] stores directly.
    for t in range(T):
        obs = obs_ref[t].astype(cdt)                                # (tb, I)

        # fc1 + ReLU
        x = jnp.dot(obs, w1, preferred_element_type=jnp.float32) + b1
        x = jnp.maximum(x, 0.0)

        # Single fused GRU matmul: (tb, 2H) x (2H, 4H) -> lane-dense (tb, 4H)
        # lanes: [r_pre | z_pre | gi_n (+b_in) | gh_n (+b_hn)]
        xh = jnp.concatenate([x, h], axis=-1).astype(cdt)           # (tb, 2H)
        g = jnp.dot(xh, wg, preferred_element_type=jnp.float32) + bg

        r = jax.nn.sigmoid(g[:, 0 * H:1 * H])
        z = jax.nn.sigmoid(g[:, 1 * H:2 * H])
        n = jnp.tanh(g[:, 2 * H:3 * H] + r * g[:, 3 * H:4 * H])
        h = (1.0 - z) * n + z * h

        # fc2
        q = jnp.dot(h.astype(cdt), w2, preferred_element_type=jnp.float32) + b2
        q_ref[t] = q.astype(q_ref.dtype)

    hout_ref[...] = h.astype(hout_ref.dtype)


def prepare_params(params, dtype=jnp.float32):
    """One-time layout work: transposes, GRU gate fusion, bias merging.

    Call once at parameter-creation time (NOT per forward).  `dtype` may be
    jnp.bfloat16 on v6e/v7x to halve weight DMA bytes; matmuls still
    accumulate in f32 and biases / elementwise math stay f32 (v5e-safe).
    """
    H = params["fc1_b"].shape[0]
    A = params["fc2_b"].shape[0]

    wih_t = params["gru_w_ih"].T             # (H, 3H), cols [r | z | n]
    whh_t = params["gru_w_hh"].T             # (H, 3H)
    bih, bhh = params["gru_b_ih"], params["gru_b_hh"]

    zeros = jnp.zeros((H, H), wih_t.dtype)
    # rows 0..H   (x part): [Wi_r | Wi_z | Wi_n | 0   ]
    # rows H..2H  (h part): [Wh_r | Wh_z | 0    | Wh_n]
    top = jnp.concatenate([wih_t, zeros], axis=1)
    bot = jnp.concatenate([whh_t[:, :2 * H], zeros, whh_t[:, 2 * H:]], axis=1)
    wg = jnp.concatenate([top, bot], axis=0)                 # (2H, 4H)

    bg = jnp.concatenate([
        bih[0:H] + bhh[0:H],                 # r
        bih[H:2 * H] + bhh[H:2 * H],         # z
        bih[2 * H:3 * H],                    # b_in (outside the r* term)
        bhh[2 * H:3 * H],                    # b_hn (inside the r* term)
    ]).reshape(1, 4 * H)

    return {
        "w1": params["fc1_w"].T.astype(dtype),               # (I, H)
        "b1": params["fc1_b"].reshape(1, H).astype(jnp.float32),
        "wg": wg.astype(dtype),                              # (2H, 4H)
        "bg": bg.astype(jnp.float32),                        # (1, 4H)
        "w2": params["fc2_w"].T.astype(dtype),               # (H, A)
        "b2": params["fc2_b"].reshape(1, A).astype(jnp.float32),
    }


@functools.partial(jax.jit, static_argnames=("b_block",))
def rnn_agent_rollout(obs_seq, h0, prepared, b_block=None):
    """Run T GRU-agent steps in ONE pallas_call (grid only over batch chunks).

    obs_seq: (T, B, input_dim)
    h0:      (B, H)
    returns: (q_seq: (T, B, A) f32, h_final: (B, H) f32)
    """
    T, B, I = obs_seq.shape
    H = h0.shape[-1]
    A = prepared["b2"].shape[-1]

    if b_block is None:
        b_block = 128 if (B > 128 and B % 128 == 0) else B
    assert B % b_block == 0, "B must be divisible by b_block"
    nb = B // b_block

    const2 = lambda b: (0, 0)               # weights: resident across chunks
    in_specs = [
        pl.BlockSpec((T, b_block, I), lambda b: (0, b, 0)),   # obs chunk
        pl.BlockSpec((b_block, H), lambda b: (b, 0)),         # h0 chunk
        pl.BlockSpec((I, H), const2),                         # w1
        pl.BlockSpec((1, H), const2),                         # b1
        pl.BlockSpec((2 * H, 4 * H), const2),                 # wg (fused)
        pl.BlockSpec((1, 4 * H), const2),                     # bg (merged)
        pl.BlockSpec((H, A), const2),                         # w2
        pl.BlockSpec((1, A), const2),                         # b2
    ]
    out_specs = (
        pl.BlockSpec((T, b_block, A), lambda b: (0, b, 0)),   # q chunk
        pl.BlockSpec((b_block, H), lambda b: (b, 0)),         # final hidden
    )

    # Advisory cost estimate for the XLA scheduler (dtype-aware weight bytes).
    wbytes = jnp.dtype(prepared["w1"].dtype).itemsize
    obytes = jnp.dtype(obs_seq.dtype).itemsize
    flops = 2 * T * B * (I * H + (2 * H) * (4 * H) + H * A)
    cost = pl.CostEstimate(
        flops=flops,
        transcendentals=T * B * 3 * H,
        bytes_accessed=(obytes * T * B * I
                        + 4 * (T * B * A + 2 * B * H)
                        + wbytes * (I * H + 2 * H * 4 * H + H * A)
                        + 4 * (H + 4 * H + A)),
    )

    q_seq, h_final = pl.pallas_call(
        _rnn_rollout_kernel,
        grid=(nb,),
        in_specs=in_specs,
        out_specs=out_specs,
        out_shape=(
            jax.ShapeDtypeStruct((T, B, A), jnp.float32),
            jax.ShapeDtypeStruct((B, H), jnp.float32),
        ),
        compiler_params=pltpu.CompilerParams(
            # Batch chunks are independent -> shard across TCs on v7x.
            dimension_semantics=("parallel",)),
        cost_estimate=cost,
    )(
        obs_seq, h0,
        prepared["w1"], prepared["b1"],
        prepared["wg"], prepared["bg"],
        prepared["w2"], prepared["b2"],
    )
    return q_seq, h_final


def rnn_agent_forward(obs, hidden_state, prepared):
    """Single-step forward matching RNNAgent.forward(obs, hidden_state)."""
    H = prepared["w2"].shape[0]
    h_in = hidden_state.reshape(-1, H)
    q_seq, h = rnn_agent_rollout(obs[None], h_in, prepared)
    return q_seq[0], h


# ----------------------------- reference & demo ------------------------------

def make_params(key, input_dim, hidden_dim, n_actions):
    """Deterministic synthetic parameters, PyTorch layout conventions."""
    ks = jax.random.split(key, 8)

    def uni(k, shape, fan_in):
        bound = 1.0 / jnp.sqrt(jnp.float32(fan_in))
        return jax.random.uniform(k, shape, jnp.float32, -bound, bound)

    H = hidden_dim
    return {
        "fc1_w": uni(ks[0], (H, input_dim), input_dim),        # nn.Linear(I, H)
        "fc1_b": uni(ks[1], (H,), input_dim),
        "gru_w_ih": uni(ks[2], (3 * H, H), H),                 # nn.GRUCell(H, H)
        "gru_w_hh": uni(ks[3], (3 * H, H), H),
        "gru_b_ih": uni(ks[4], (3 * H,), H),
        "gru_b_hh": uni(ks[5], (3 * H,), H),
        "fc2_w": uni(ks[6], (n_actions, H), H),                # nn.Linear(H, A)
        "fc2_b": uni(ks[7], (n_actions,), H),
    }


def reference_forward(obs, hidden_state, params, hidden_dim):
    """Plain-JAX single-step reference mirroring the PyTorch module."""
    H = hidden_dim
    x = jax.nn.relu(obs @ params["fc1_w"].T + params["fc1_b"])
    h_in = hidden_state.reshape(-1, H)
    gi = x @ params["gru_w_ih"].T + params["gru_b_ih"]
    gh = h_in @ params["gru_w_hh"].T + params["gru_b_hh"]
    i_r, i_z, i_n = gi[:, :H], gi[:, H:2 * H], gi[:, 2 * H:]
    h_r, h_z, h_n = gh[:, :H], gh[:, H:2 * H], gh[:, 2 * H:]
    r = jax.nn.sigmoid(i_r + h_r)
    z = jax.nn.sigmoid(i_z + h_z)
    n = jnp.tanh(i_n + r * h_n)
    h = (1.0 - z) * n + z * h_in
    q = h @ params["fc2_w"].T + params["fc2_b"]
    return q, h


def reference_rollout(obs_seq, h0, params, hidden_dim):
    def step(h, obs):
        q, h_new = reference_forward(obs, h, params, hidden_dim)
        return h_new, q
    h_final, q_seq = jax.lax.scan(step, h0, obs_seq)
    return q_seq, h_final


if __name__ == "__main__":
    B = 256            # n_agents * n_envs; split into 128-row chunks (MXU rows)
    INPUT_DIM = 24     # input_shape
    HIDDEN = 32        # args.rnn_hidden_dim
    N_ACTIONS = 8      # args.n_actions
    T = 8              # rollout length

    key = jax.random.PRNGKey(0)
    k_obs, k_h, k_params = jax.random.split(key, 3)

    obs_seq = jax.random.normal(k_obs, (T, B, INPUT_DIM), jnp.float32)
    # init_hidden() is zeros; use a nonzero hidden to exercise the GRU path.
    hidden0 = 0.1 * jax.random.normal(k_h, (B, HIDDEN), jnp.float32)
    params = make_params(k_params, INPUT_DIM, HIDDEN, N_ACTIONS)
    prepared = prepare_params(params)      # one-time layout work (f32 demo)

    # --- single step (matches the PyTorch module's forward) ---
    q1, h1 = rnn_agent_forward(obs_seq[0], hidden0, prepared)
    jax.block_until_ready((q1, h1))
    q1_ref, h1_ref = reference_forward(obs_seq[0], hidden0, params, HIDDEN)
    assert q1.shape == (B, N_ACTIONS) and h1.shape == (B, HIDDEN)
    assert jnp.allclose(q1, q1_ref, atol=2e-5, rtol=2e-5)
    assert jnp.allclose(h1, h1_ref, atol=2e-5, rtol=2e-5)

    # --- T-step rollout in a single pallas_call ---
    q_seq, h_T = rnn_agent_rollout(obs_seq, hidden0, prepared)
    jax.block_until_ready((q_seq, h_T))
    q_seq_ref, h_T_ref = reference_rollout(obs_seq, hidden0, params, HIDDEN)
    assert q_seq.shape == (T, B, N_ACTIONS) and h_T.shape == (B, HIDDEN)
    assert jnp.allclose(q_seq, q_seq_ref, atol=1e-4, rtol=1e-4)
    assert jnp.allclose(h_T, h_T_ref, atol=1e-4, rtol=1e-4)

    print("KERNEL_OK")
</pallas_src>

<mosaic_0001>
module attributes {stable_mosaic.version = 11 : i64} {
  func.func @_rnn_rollout_kernel(%arg0: i32, %arg1: memref<1x128x24xf32, #tpu.memory_space<vmem>>, %arg2: memref<128x32xf32, #tpu.memory_space<vmem>>, %arg3: memref<24x32xf32, #tpu.memory_space<vmem>>, %arg4: memref<1x32xf32, #tpu.memory_space<vmem>>, %arg5: memref<64x128xf32, #tpu.memory_space<vmem>>, %arg6: memref<1x128xf32, #tpu.memory_space<vmem>>, %arg7: memref<32x8xf32, #tpu.memory_space<vmem>>, %arg8: memref<1x8xf32, #tpu.memory_space<vmem>>, %arg9: memref<1x128x8xf32, #tpu.memory_space<vmem>>, %arg10: memref<128x32xf32, #tpu.memory_space<vmem>>) attributes {dimension_semantics = [#tpu.dimension_semantics<parallel>], iteration_bounds = array<i64: 2>, scalar_prefetch = 0 : i64, scratch_operands = 0 : i64, tpu.core_type = #tpu.core_type<tc>, window_params = [{transform_indices = @transform_0, window_bounds = array<i64: 1, 128, 24>}, {transform_indices = @transform_1, window_bounds = array<i64: 128, 32>}, {pipeline_mode = #tpu.pipeline_mode<synchronous>, transform_indices = @transform_2, window_bounds = array<i64: 24, 32>}, {pipeline_mode = #tpu.pipeline_mode<synchronous>, transform_indices = @transform_3, window_bounds = array<i64: 1, 32>}, {pipeline_mode = #tpu.pipeline_mode<synchronous>, transform_indices = @transform_4, window_bounds = array<i64: 64, 128>}, {pipeline_mode = #tpu.pipeline_mode<synchronous>, transform_indices = @transform_5, window_bounds = array<i64: 1, 128>}, {pipeline_mode = #tpu.pipeline_mode<synchronous>, transform_indices = @transform_6, window_bounds = array<i64: 32, 8>}, {pipeline_mode = #tpu.pipeline_mode<synchronous>, transform_indices = @transform_7, window_bounds = array<i64: 1, 8>}, {transform_indices = @transform_8, window_bounds = array<i64: 1, 128, 8>}, {transform_indices = @transform_9, window_bounds = array<i64: 128, 32>}]} {
    %c0 = arith.constant 0 : index
    %c0_0 = arith.constant 0 : index
    %0 = vector.load %arg3[%c0, %c0_0] : memref<24x32xf32, #tpu.memory_space<vmem>>, vector<24x32xf32>
    %c0_1 = arith.constant 0 : index
    %c0_2 = arith.constant 0 : index
    %1 = vector.load %arg4[%c0_1, %c0_2] : memref<1x32xf32, #tpu.memory_space<vmem>>, vector<1x32xf32>
    %c0_3 = arith.constant 0 : index
    %c0_4 = arith.constant 0 : index
    %2 = vector.load %arg5[%c0_3, %c0_4] : memref<64x128xf32, #tpu.memory_space<vmem>>, vector<64x128xf32>
    %c0_5 = arith.constant 0 : index
    %c0_6 = arith.constant 0 : index
    %3 = vector.load %arg6[%c0_5, %c0_6] : memref<1x128xf32, #tpu.memory_space<vmem>>, vector<1x128xf32>
    %c0_7 = arith.constant 0 : index
    %c0_8 = arith.constant 0 : index
    %4 = vector.load %arg7[%c0_7, %c0_8] : memref<32x8xf32, #tpu.memory_space<vmem>>, vector<32x8xf32>
    %c0_9 = arith.constant 0 : index
    %c0_10 = arith.constant 0 : index
    %5 = vector.load %arg8[%c0_9, %c0_10] : memref<1x8xf32, #tpu.memory_space<vmem>>, vector<1x8xf32>
    %c0_11 = arith.constant 0 : index
    %c0_12 = arith.constant 0 : index
    %6 = vector.load %arg2[%c0_11, %c0_12] : memref<128x32xf32, #tpu.memory_space<vmem>>, vector<128x32xf32>
    %c0_13 = arith.constant 0 : index
    %c0_14 = arith.constant 0 : index
    %c0_15 = arith.constant 0 : index
    %7 = vector.load %arg1[%c0_13, %c0_14, %c0_15] : memref<1x128x24xf32, #tpu.memory_space<vmem>>, vector<1x128x24xf32>
    %8 = vector.shape_cast %7 : vector<1x128x24xf32> to vector<128x24xf32>
    %cst = arith.constant dense<0.000000e+00> : vector<128x32xf32>
    %9 = tpu.matmul %8, %0, %cst {dimension_numbers = #tpu.dot_dimension_numbers<[1], [0], [0], [1], [0, 0, 1, 1], [], []>} : vector<128x24xf32>, vector<24x32xf32>, vector<128x32xf32> -> vector<128x32xf32>
    %10 = vector.broadcast %1 : vector<1x32xf32> to vector<128x32xf32>
    %11 = arith.addf %9, %10 : vector<128x32xf32>
    %cst_16 = arith.constant 0.000000e+00 : f32
    %12 = vector.broadcast %cst_16 : f32 to vector<128x32xf32>
    %13 = arith.maximumf %11, %12 : vector<128x32xf32>
    %14 = tpu.concatenate %13, %6 in 1 : vector<128x32xf32>, vector<128x32xf32> -> vector<128x64xf32>
    %cst_17 = arith.constant dense<0.000000e+00> : vector<128x128xf32>
    %15 = tpu.matmul %14, %2, %cst_17 {dimension_numbers = #tpu.dot_dimension_numbers<[1], [0], [0], [1], [0, 0, 1, 1], [], []>} : vector<128x64xf32>, vector<64x128xf32>, vector<128x128xf32> -> vector<128x128xf32>
    %16 = vector.broadcast %3 : vector<1x128xf32> to vector<128x128xf32>
    %17 = arith.addf %15, %16 : vector<128x128xf32>
    %18 = vector.extract_strided_slice %17 {offsets = [0, 0], sizes = [128, 32], strides = [1, 1]} : vector<128x128xf32> to vector<128x32xf32>
    %19 = arith.negf %18 : vector<128x32xf32>
    %20 = math.exp %19 : vector<128x32xf32>
    %cst_18 = arith.constant 1.000000e+00 : f32
    %21 = vector.broadcast %cst_18 : f32 to vector<128x32xf32>
    %22 = arith.addf %21, %20 : vector<128x32xf32>
    %23 = arith.divf %21, %22 : vector<128x32xf32>
    %24 = vector.extract_strided_slice %17 {offsets = [0, 32], sizes = [128, 32], strides = [1, 1]} : vector<128x128xf32> to vector<128x32xf32>
    %25 = arith.negf %24 : vector<128x32xf32>
    %26 = math.exp %25 : vector<128x32xf32>
    %cst_19 = arith.constant 1.000000e+00 : f32
    %27 = vector.broadcast %cst_19 : f32 to vector<128x32xf32>
    %28 = arith.addf %27, %26 : vector<128x32xf32>
    %29 = arith.divf %27, %28 : vector<128x32xf32>
    %30 = vector.extract_strided_slice %17 {offsets = [0, 64], sizes = [128, 32], strides = [1, 1]} : vector<128x128xf32> to vector<128x32xf32>
    %31 = vector.extract_strided_slice %17 {offsets = [0, 96], sizes = [128, 32], strides = [1, 1]} : vector<128x128xf32> to vector<128x32xf32>
    %32 = arith.mulf %23, %31 : vector<128x32xf32>
    %33 = arith.addf %30, %32 : vector<128x32xf32>
    %34 = math.tanh %33 : vector<128x32xf32>
    %cst_20 = arith.constant 1.000000e+00 : f32
    %35 = vector.broadcast %cst_20 : f32 to vector<128x32xf32>
    %36 = arith.subf %35, %29 : vector<128x32xf32>
    %37 = arith.mulf %36, %34 : vector<128x32xf32>
    %38 = arith.mulf %29, %6 : vector<128x32xf32>
    %39 = arith.addf %37, %38 : vector<128x32xf32>
    %cst_21 = arith.constant dense<0.000000e+00> : vector<128x8xf32>
    %40 = tpu.matmul %39, %4, %cst_21 {dimension_numbers = #tpu.dot_dimension_numbers<[1], [0], [0], [1], [0, 0, 1, 1], [], []>} : vector<128x32xf32>, vector<32x8xf32>, vector<128x8xf32> -> vector<128x8xf32>
    %41 = vector.broadcast %5 : vector<1x8xf32> to vector<128x8xf32>
    %42 = arith.addf %40, %41 : vector<128x8xf32>
    %c0_22 = arith.constant 0 : index
    %c0_23 = arith.constant 0 : index
    %c0_24 = arith.constant 0 : index
    %43 = vector.load %arg9[%c0_22, %c0_23, %c0_24] : memref<1x128x8xf32, #tpu.memory_space<vmem>>, vector<1x128x8xf32>
    %44 = vector.shape_cast %43 : vector<1x128x8xf32> to vector<128x8xf32>
    %45 = vector.shape_cast %42 : vector<128x8xf32> to vector<1x128x8xf32>
    tpu.vector_store %arg9[%c0_22, %c0_23, %c0_24], %45 {strides = array<i32>} : memref<1x128x8xf32, #tpu.memory_space<vmem>>, vector<1x128x8xf32>,
    %c0_25 = arith.constant 0 : index
    %c0_26 = arith.constant 0 : index
    %46 = vector.load %arg10[%c0_25, %c0_26] : memref<128x32xf32, #tpu.memory_space<vmem>>, vector<128x32xf32>
    tpu.vector_store %arg10[%c0_25, %c0_26], %39 {strides = array<i32>} : memref<128x32xf32, #tpu.memory_space<vmem>>, vector<128x32xf32>,
    return
  }
  func.func @transform_0(%arg0: i32) -> (i32, i32, i32) {
    %c0_i32 = arith.constant 0 : i32
    %c0_i32_0 = arith.constant 0 : i32
    %c0_i32_1 = arith.constant 0 : i32
    return %c0_i32, %arg0, %c0_i32_0 : i32, i32, i32
  }
  func.func @transform_1(%arg0: i32) -> (i32, i32) {
    %c0_i32 = arith.constant 0 : i32
    %c0_i32_0 = arith.constant 0 : i32
    return %arg0, %c0_i32 : i32, i32
  }
  func.func @transform_2(%arg0: i32) -> (i32, i32) {
    %c0_i32 = arith.constant 0 : i32
    %c0_i32_0 = arith.constant 0 : i32
    %c0_i32_1 = arith.constant 0 : i32
    return %c0_i32, %c0_i32_0 : i32, i32
  }
  func.func @transform_3(%arg0: i32) -> (i32, i32) {
    %c0_i32 = arith.constant 0 : i32
    %c0_i32_0 = arith.constant 0 : i32
    %c0_i32_1 = arith.constant 0 : i32
    return %c0_i32, %c0_i32_0 : i32, i32
  }
  func.func @transform_4(%arg0: i32) -> (i32, i32) {
    %c0_i32 = arith.constant 0 : i32
    %c0_i32_0 = arith.constant 0 : i32
    %c0_i32_1 = arith.constant 0 : i32
    return %c0_i32, %c0_i32_0 : i32, i32
  }
  func.func @transform_5(%arg0: i32) -> (i32, i32) {
    %c0_i32 = arith.constant 0 : i32
    %c0_i32_0 = arith.constant 0 : i32
    %c0_i32_1 = arith.constant 0 : i32
    return %c0_i32, %c0_i32_0 : i32, i32
  }
  func.func @transform_6(%arg0: i32) -> (i32, i32) {
    %c0_i32 = arith.constant 0 : i32
    %c0_i32_0 = arith.constant 0 : i32
    %c0_i32_1 = arith.constant 0 : i32
    return %c0_i32, %c0_i32_0 : i32, i32
  }
  func.func @transform_7(%arg0: i32) -> (i32, i32) {
    %c0_i32 = arith.constant 0 : i32
    %c0_i32_0 = arith.constant 0 : i32
    %c0_i32_1 = arith.constant 0 : i32
    return %c0_i32, %c0_i32_0 : i32, i32
  }
  func.func @transform_8(%arg0: i32) -> (i32, i32, i32) {
    %c0_i32 = arith.constant 0 : i32
    %c0_i32_0 = arith.constant 0 : i32
    %c0_i32_1 = arith.constant 0 : i32
    return %c0_i32, %arg0, %c0_i32_0 : i32, i32, i32
  }
  func.func @transform_9(%arg0: i32) -> (i32, i32) {
    %c0_i32 = arith.constant 0 : i32
    %c0_i32_0 = arith.constant 0 : i32
    return %arg0, %c0_i32 : i32, i32
  }
}

</mosaic_0001>

<llo_original>
// kernel: rnn_agent_rollout.1
$region0: #{rnn_agent_rollout.1}
  #allocation0 [shape = 'u32[]', space=smem, size = 0x4, offset = 0x4, fixed_abs, tag = 'smem constant byte address 0x4 - core index']
  #allocation1 [shape = 'u32[144,128]{1,0:T(1,128)}', space=vmem, size = 0x12000, scoped, tag = 'internal scratch']
  %s0 = inlined_call_operand.vmem [shape: f32[1,256,24], index: 0, kind: input, shape index: {}]
  %s1 = inlined_call_operand.vmem [shape: f32[256,32], index: 1, kind: input, shape index: {}]
  %s2 = inlined_call_operand.vmem [shape: f32[24,32], index: 2, kind: input, shape index: {}]
  %s3 = inlined_call_operand.vmem [shape: f32[1,32], index: 3, kind: input, shape index: {}]
  %s4 = inlined_call_operand.vmem [shape: f32[64,128], index: 4, kind: input, shape index: {}]
  %s5 = inlined_call_operand.vmem [shape: f32[1,128], index: 5, kind: input, shape index: {}]
  %s6 = inlined_call_operand.vmem [shape: f32[32,8], index: 6, kind: input, shape index: {}]
  %s7 = inlined_call_operand.vmem [shape: f32[1,8], index: 7, kind: input, shape index: {}]
  %s8 = inlined_call_operand.vmem [shape: f32[1,256,8], index: 8, kind: output, shape index: {0}]
  %s9 = inlined_call_operand.vmem [shape: f32[256,32], index: 9, kind: output, shape index: {1}]
  %10 = xla_tuple %s8, %s9
  %s11 = sld [smem:[#allocation0]]
  $region73: #{rnn_agent_rollout.1} parent=0
    _
  %s13 = ssub.s32 1, %s11
  %s14 = scalar_select 0, %s13, %s11
  loop: start=0, step=1, limit=4
  $region2: #{rnn_agent_rollout.1} parent=0 // loop_pre_header
    _
  $region3: #{rnn_agent_rollout.1} parent=0 // loop_header
    %s16 = sphi 0, %s20
    %p17 = scmp.ge.s32.totalorder %s16, 4
    %s26 = sphi 0, %s28
    %s29 = sphi 0, %s26
    %s30 = sphi 0, %s29
    %s46 = sphi 0, %s30
    %s52 = sphi 0, %s54
    %s55 = sphi 0, %s52
    %s56 = sphi 0, %s55
    %s72 = sphi 0, %s56
    %s76 = sphi 0, %s76
    %s78 = sphi 0, %s76
    %s79 = sphi 0, %s78
    %s93 = sphi 0, %s79
    %s97 = sphi 0, %s97
    %s99 = sphi 0, %s97
    %s100 = sphi 0, %s99
    %s114 = sphi 0, %s100
    %s118 = sphi 0, %s118
    %s120 = sphi 0, %s118
    %s121 = sphi 0, %s120
    %s135 = sphi 0, %s121
    %s139 = sphi 0, %s139
    %s141 = sphi 0, %s139
    %s142 = sphi 0, %s141
    %s156 = sphi 0, %s142
    %s160 = sphi 0, %s160
    %s162 = sphi 0, %s160
    %s163 = sphi 0, %s162
    %s177 = sphi 0, %s163
    %s181 = sphi 0, %s181
    %s183 = sphi 0, %s181
    %s184 = sphi 0, %s183
    %s198 = sphi 0, %s184
    %s204 = sphi 0, %s206
    %s207 = sphi 0, %s204
    %s208 = sphi 0, %s207
    %s224 = sphi 0, %s208
    %s230 = sphi 0, %s232
    %s233 = sphi 0, %s230
    %s234 = sphi 0, %s233
    %s250 = sphi 0, %s234
  $region4: #{rnn_agent_rollout.1} parent=0 // loop_header_branch
    %19 = sbr.rel (%p17) target = $region8
  $region5: #{rnn_agent_rollout.1} parent=0 // loop_body
    %s21 = ssub.s32 %s16, 1
    %s22 = ssub.s32 %s16, 2
    %s23 = sadd.s32 %s16, 1
    %s24 = ssub.s32 %s16, %s23
    %p25 = scmp.eq.s32.totalorder %s24, 0
    %s27 = sadd.s32 %s26, 1
    %s28 = scalar_select %p25, %s26, %s27
    %p31 = pneg %p25
    %p32 = scmp.eq.s32.totalorder %s16, 1
    %p33 = por %p31, %p32
    %p34 = scmp.ne.s32.totalorder %s26, %s29
    %p35 = scmp.eq.s32.totalorder %s16, 0
    %p36 = por %p34, %p35
    %p37 = scmp.ne.s32.totalorder %s26, %s29
    %p38 = scmp.eq.s32.totalorder %s21, 1
    %p39 = por %p37, %p38
    %p40 = scmp.ne.s32.totalorder %s29, %s30
    %p41 = scmp.eq.s32.totalorder %s21, 0
    %p42 = por %p40, %p41
    %p43 = scmp.ne.s32.totalorder %s29, %s30
    %p44 = scmp.eq.s32.totalorder %s22, 1
    %p45 = por %p43, %p44
    %p47 = scmp.ne.s32.totalorder %s30, %s46
    %p48 = scmp.eq.s32.totalorder %s22, 0
    %p49 = por %p47, %p48
    %s50 = ssub.s32 %s16, %s23
    %p51 = scmp.eq.s32.totalorder %s50, 0
    %s53 = sadd.s32 %s52, 1
    %s54 = scalar_select %p51, %s52, %s53
    %p57 = pneg %p51
    %p58 = scmp.eq.s32.totalorder %s16, 1
    %p59 = por %p57, %p58
    %p60 = scmp.ne.s32.totalorder %s52, %s55
    %p61 = scmp.eq.s32.totalorder %s16, 0
    %p62 = por %p60, %p61
    %p63 = scmp.ne.s32.totalorder %s52, %s55
    %p64 = scmp.eq.s32.totalorder %s21, 1
    %p65 = por %p63, %p64
    %p66 = scmp.ne.s32.totalorder %s55, %s56
    %p67 = scmp.eq.s32.totalorder %s21, 0
    %p68 = por %p66, %p67
    %p69 = scmp.ne.s32.totalorder %s55, %s56
    %p70 = scmp.eq.s32.totalorder %s22, 1
    %p71 = por %p69, %p70
    %p73 = scmp.ne.s32.totalorder %s56, %s72
    %p74 = scmp.eq.s32.totalorder %s22, 0
    %p75 = por %p73, %p74
    %s77 = sadd.s32 %s76, 1
    %p80 = scmp.eq.s32.totalorder %s16, 1
    %p81 = scmp.ne.s32.totalorder %s76, %s78
    %p82 = scmp.eq.s32.totalorder %s16, 0
    %p83 = por %p81, %p82
    %p84 = scmp.ne.s32.totalorder %s76, %s78
    %p85 = scmp.eq.s32.totalorder %s21, 1
    %p86 = por %p84, %p85
    %p87 = scmp.ne.s32.totalorder %s78, %s79
    %p88 = scmp.eq.s32.totalorder %s21, 0
    %p89 = por %p87, %p88
    %p90 = scmp.ne.s32.totalorder %s78, %s79
    %p91 = scmp.eq.s32.totalorder %s22, 1
    %p92 = por %p90, %p91
    %p94 = scmp.ne.s32.totalorder %s79, %s93
    %p95 = scmp.eq.s32.totalorder %s22, 0
    %p96 = por %p94, %p95
    %s98 = sadd.s32 %s97, 1
    %p101 = scmp.eq.s32.totalorder %s16, 1
    %p102 = scmp.ne.s32.totalorder %s97, %s99
    %p103 = scmp.eq.s32.totalorder %s16, 0
    %p104 = por %p102, %p103
    %p105 = scmp.ne.s32.totalorder %s97, %s99
    %p106 = scmp.eq.s32.totalorder %s21, 1
    %p107 = por %p105, %p106
    %p108 = scmp.ne.s32.totalorder %s99, %s100
    %p109 = scmp.eq.s32.totalorder %s21, 0
    %p110 = por %p108, %p109
    %p111 = scmp.ne.s32.totalorder %s99, %s100
    %p112 = scmp.eq.s32.totalorder %s22, 1
    %p113 = por %p111, %p112
    %p115 = scmp.ne.s32.totalorder %s100, %s114
    %p116 = scmp.eq.s32.totalorder %s22, 0
    %p117 = por %p115, %p116
    %s119 = sadd.s32 %s118, 1
    %p122 = scmp.eq.s32.totalorder %s16, 1
    %p123 = scmp.ne.s32.totalorder %s118, %s120
    %p124 = scmp.eq.s32.totalorder %s16, 0
    %p125 = por %p123, %p124
    %p126 = scmp.ne.s32.totalorder %s118, %s120
    %p127 = scmp.eq.s32.totalorder %s21, 1
    %p128 = por %p126, %p127
    %p129 = scmp.ne.s32.totalorder %s120, %s121
    %p130 = scmp.eq.s32.totalorder %s21, 0
    %p131 = por %p129, %p130
    %p132 = scmp.ne.s32.totalorder %s120, %s121
    %p133 = scmp.eq.s32.totalorder %s22, 1
    %p134 = por %p132, %p133
    %p136 = scmp.ne.s32.totalorder %s121, %s135
    %p137 = scmp.eq.s32.totalorder %s22, 0
    %p138 = por %p136, %p137
    %s140 = sadd.s32 %s139, 1
    %p143 = scmp.eq.s32.totalorder %s16, 1
    %p144 = scmp.ne.s32.totalorder %s139, %s141
    %p145 = scmp.eq.s32.totalorder %s16, 0
    %p146 = por %p144, %p145
    %p147 = scmp.ne.s32.totalorder %s139, %s141
    %p148 = scmp.eq.s32.totalorder %s21, 1
    %p149 = por %p147, %p148
    %p150 = scmp.ne.s32.totalorder %s141, %s142
    %p151 = scmp.eq.s32.totalorder %s21, 0
    %p152 = por %p150, %p151
    %p153 = scmp.ne.s32.totalorder %s141, %s142
    %p154 = scmp.eq.s32.totalorder %s22, 1
    %p155 = por %p153, %p154
    %p157 = scmp.ne.s32.totalorder %s142, %s156
    %p158 = scmp.eq.s32.totalorder %s22, 0
    %p159 = por %p157, %p158
    %s161 = sadd.s32 %s160, 1
    %p164 = scmp.eq.s32.totalorder %s16, 1
    %p165 = scmp.ne.s32.totalorder %s160, %s162
    %p166 = scmp.eq.s32.totalorder %s16, 0
    %p167 = por %p165, %p166
    %p168 = scmp.ne.s32.totalorder %s160, %s162
    %p169 = scmp.eq.s32.totalorder %s21, 1
    %p170 = por %p168, %p169
    %p171 = scmp.ne.s32.totalorder %s162, %s163
    %p172 = scmp.eq.s32.totalorder %s21, 0
    %p173 = por %p171, %p172
    %p174 = scmp.ne.s32.totalorder %s162, %s163
    %p175 = scmp.eq.s32.totalorder %s22, 1
    %p176 = por %p174, %p175
    %p178 = scmp.ne.s32.totalorder %s163, %s177
    %p179 = scmp.eq.s32.totalorder %s22, 0
    %p180 = por %p178, %p179
    %s182 = sadd.s32 %s181, 1
    %p185 = scmp.eq.s32.totalorder %s16, 1
    %p186 = scmp.ne.s32.totalorder %s181, %s183
    %p187 = scmp.eq.s32.totalorder %s16, 0
    %p188 = por %p186, %p187
    %p189 = scmp.ne.s32.totalorder %s181, %s183
    %p190 = scmp.eq.s32.totalorder %s21, 1
    %p191 = por %p189, %p190
    %p192 = scmp.ne.s32.totalorder %s183, %s184
    %p193 = scmp.eq.s32.totalorder %s21, 0
    %p194 = por %p192, %p193
    %p195 = scmp.ne.s32.totalorder %s183, %s184
    %p196 = scmp.eq.s32.totalorder %s22, 1
    %p197 = por %p195, %p196
    %p199 = scmp.ne.s32.totalorder %s184, %s198
    %p200 = scmp.eq.s32.totalorder %s22, 0
    %p201 = por %p199, %p200
    %s202 = ssub.s32 %s16, %s23
    %p203 = scmp.eq.s32.totalorder %s202, 0
    %s205 = sadd.s32 %s204, 1
    %s206 = scalar_select %p203, %s204, %s205
    %p209 = pneg %p203
    %p210 = scmp.eq.s32.totalorder %s16, 1
    %p211 = por %p209, %p210
    %p212 = scmp.ne.s32.totalorder %s204, %s207
    %p213 = scmp.eq.s32.totalorder %s16, 0
    %p214 = por %p212, %p213
    %p215 = scmp.ne.s32.totalorder %s204, %s207
    %p216 = scmp.eq.s32.totalorder %s21, 1
    %p217 = por %p215, %p216
    %p218 = scmp.ne.s32.totalorder %s207, %s208
    %p219 = scmp.eq.s32.totalorder %s21, 0
    %p220 = por %p218, %p219
    %p221 = scmp.ne.s32.totalorder %s207, %s208
    %p222 = scmp.eq.s32.totalorder %s22, 1
    %p223 = por %p221, %p222
    %p225 = scmp.ne.s32.totalorder %s208, %s224
    %p226 = scmp.eq.s32.totalorder %s22, 0
    %p227 = por %p225, %p226
    %s228 = ssub.s32 %s16, %s23
    %p229 = scmp.eq.s32.totalorder %s228, 0
    %s231 = sadd.s32 %s230, 1
    %s232 = scalar_select %p229, %s230, %s231
    %p235 = pneg %p229
    %p236 = scmp.eq.s32.totalorder %s16, 1
    %p237 = por %p235, %p236
    %p238 = scmp.ne.s32.totalorder %s230, %s233
    %p239 = scmp.eq.s32.totalorder %s16, 0
    %p240 = por %p238, %p239
    %p241 = scmp.ne.s32.totalorder %s230, %s233
    %p242 = scmp.eq.s32.totalorder %s21, 1
    %p243 = por %p241, %p242
    %p244 = scmp.ne.s32.totalorder %s233, %s234
    %p245 = scmp.eq.s32.totalorder %s21, 0
    %p246 = por %p244, %p245
    %p247 = scmp.ne.s32.totalorder %s233, %s234
    %p248 = scmp.eq.s32.totalorder %s22, 1
    %p249 = por %p247, %p248
    %p251 = scmp.ne.s32.totalorder %s234, %s250
    %p252 = scmp.eq.s32.totalorder %s22, 0
    %p253 = por %p251, %p252
    %p254 = scmp.le.s32.totalorder 1, %s16
    %p255 = scmp.lt.s32.totalorder %s16, 3
    %p256 = pnand %p254, %p255
    %p257 = pneg %p256
    // Predicated region
    $region9: #{rnn_agent_rollout.1} parent=5 // pred_check
      _
    $region10: #{rnn_agent_rollout.1} parent=5 // pred_check_branch
      %259 = sbr.rel (%p256) target = $region12
    $region11: #{rnn_agent_rollout.1} parent=5 // pred_region
      %s260 = ssub.s32 %s16, 1
      // Predicated region
      $region13: #{rnn_agent_rollout.1} parent=11 // pred_check
        %p261 = pneg %p89
      $region14: #{rnn_agent_rollout.1} parent=11 // pred_check_branch
        %263 = sbr.rel (%p261) target = $region16
      $region15: #{rnn_agent_rollout.1} parent=11 // pred_region
        _
      $region16: #{rnn_agent_rollout.1} parent=11 // pred_fallthru
        _
      // Predicated region
      $region17: #{rnn_agent_rollout.1} parent=11 // pred_check
        %p264 = pneg %p110
      $region18: #{rnn_agent_rollout.1} parent=11 // pred_check_branch
        %266 = sbr.rel (%p264) target = $region20
      $region19: #{rnn_agent_rollout.1} parent=11 // pred_region
        _
      $region20: #{rnn_agent_rollout.1} parent=11 // pred_fallthru
        _
      // Predicated region
      $region21: #{rnn_agent_rollout.1} parent=11 // pred_check
        %p267 = pneg %p131
      $region22: #{rnn_agent_rollout.1} parent=11 // pred_check_branch
        %269 = sbr.rel (%p267) target = $region24
      $region23: #{rnn_agent_rollout.1} parent=11 // pred_region
        _
      $region24: #{rnn_agent_rollout.1} parent=11 // pred_fallthru
        _
      // Predicated region
      $region25: #{rnn_agent_rollout.1} parent=11 // pred_check
        %p270 = pneg %p152
      $region26: #{rnn_agent_rollout.1} parent=11 // pred_check_branch
        %272 = sbr.rel (%p270) target = $region28
      $region27: #{rnn_agent_rollout.1} parent=11 // pred_region
        _
      $region28: #{rnn_agent_rollout.1} parent=11 // pred_fallthru
        _
      // Predicated region
      $region29: #{rnn_agent_rollout.1} parent=11 // pred_check
        %p273 = pneg %p173
      $region30: #{rnn_agent_rollout.1} parent=11 // pred_check_branch
        %275 = sbr.rel (%p273) target = $region32
      $region31: #{rnn_agent_rollout.1} parent=11 // pred_region
        _
      $region32: #{rnn_agent_rollout.1} parent=11 // pred_fallthru
        _
      // Predicated region
      $region33: #{rnn_agent_rollout.1} parent=11 // pred_check
        %p276 = pneg %p194
      $region34: #{rnn_agent_rollout.1} parent=11 // pred_check_branch
        %278 = sbr.rel (%p276) target = $region36
      $region35: #{rnn_agent_rollout.1} parent=11 // pred_region
        _
      $region36: #{rnn_agent_rollout.1} parent=11 // pred_fallthru
        _
    $region12: #{rnn_agent_rollout.1} parent=5 // pred_fallthru
      _
    %p279 = scmp.lt.s32.totalorder %s16, 2
    // Predicated region
    $region37: #{rnn_agent_rollout.1} parent=5 // pred_check
      %p280 = pneg %p279
    $region38: #{rnn_agent_rollout.1} parent=5 // pred_check_branch
      %282 = sbr.rel (%p280) target = $region40
    $region39: #{rnn_agent_rollout.1} parent=5 // pred_region
      // Predicated region
      $region41: #{rnn_agent_rollout.1} parent=39 // pred_check
        %p283 = pneg %p36
      $region42: #{rnn_agent_rollout.1} parent=39 // pred_check_branch
        %285 = sbr.rel (%p283) target = $region44
      $region43: #{rnn_agent_rollout.1} parent=39 // pred_region
        %s286 = smul.u32 16, %s16
        %p287 = scmp.lt.s32.totalorder %s286, 31
        %s288 = scalar_select %p287, %s286, 31
        %s289 = smul.addr %s288, 8
        %s290 = scalar_lea.vmem %s0, %s289
        %s291 = smul.u32 16, %s16
      $region44: #{rnn_agent_rollout.1} parent=39 // pred_fallthru
        _
      // Predicated region
      $region45: #{rnn_agent_rollout.1} parent=39 // pred_check
        %p292 = pneg %p62
      $region46: #{rnn_agent_rollout.1} parent=39 // pred_check_branch
        %294 = sbr.rel (%p292) target = $region48
      $region47: #{rnn_agent_rollout.1} parent=39 // pred_region
        %s295 = smul.u32 16, %s16
        %p296 = scmp.lt.s32.totalorder %s295, 31
        %s297 = scalar_select %p296, %s295, 31
        %s298 = smul.addr %s297, 8
        %s299 = scalar_lea.vmem %s1, %s298
        %s300 = smul.u32 16, %s16
      $region48: #{rnn_agent_rollout.1} parent=39 // pred_fallthru
        _
    $region40: #{rnn_agent_rollout.1} parent=5 // pred_fallthru
      _
    %p301 = scmp.le.s32.totalorder 1, %s16
    %p302 = scmp.lt.s32.totalorder %s16, 3
    %p303 = pnand %p301, %p302
    %p304 = pneg %p303
    // Predicated region
    $region49: #{rnn_agent_rollout.1} parent=5 // pred_check
      _
    $region50: #{rnn_agent_rollout.1} parent=5 // pred_check_branch
      %306 = sbr.rel (%p303) target = $region52
    $region51: #{rnn_agent_rollout.1} parent=5 // pred_region
      %s307 = ssub.s32 %s16, 1
      %s308 = smul.u32 16, %s21
      %p309 = scmp.lt.s32.totalorder %s308, 31
      %s310 = scalar_select %p309, %s308, 31
      %s311 = smul.addr %s310, 8
      %s312 = scalar_lea.vmem %s0, %s311
      %p313 = pneg %p42
      %p314 = pneg %p39
      %s315 = smul.u32 16, %s21
      %p316 = scmp.lt.s32.totalorder %s315, 31
      %s317 = scalar_select %p316, %s315, 31
      %s318 = smul.addr %s317, 8
      %s319 = scalar_lea.vmem %s1, %s318
      %p320 = pneg %p68
      %p321 = pneg %p65
      %p322 = pneg %p89
      %p323 = pneg %p86
      %p324 = pneg %p110
      %p325 = pneg %p107
      %p326 = pneg %p131
      %p327 = pneg %p128
      %p328 = pneg %p152
      %p329 = pneg %p149
      %p330 = pneg %p173
      %p331 = pneg %p170
      %p332 = pneg %p194
      %p333 = pneg %p191
      %p334 = pneg %p220
      %p335 = pneg %p217
      %s336 = smul.u32 16, %s21
      %p337 = scmp.lt.s32.totalorder %s336, 31
      %s338 = scalar_select %p337, %s336, 31
      %s339 = smul.addr %s338, 8
      %s340 = scalar_lea.vmem %s8, %s339
      %p341 = pneg %p246
      %p342 = pneg %p243
      %s343 = smul.u32 16, %s21
      %p344 = scmp.lt.s32.totalorder %s343, 31
      %s345 = scalar_select %p344, %s343, 31
      %s346 = smul.addr %s345, 8
      %s347 = scalar_lea.vmem %s9, %s346
      %s348 = smul.u32 16, %s21
      %p349 = scmp.lt.s32.totalorder %s348, 31
      %s350 = scalar_select %p349, %s348, 31
      %s351 = smul.addr %s350, 8
      %s352 = scalar_lea.vmem %s0, %s351
      %s353 = smul.u32 16, %s21
      %s354 = smul.u32 16, %s21
      %p355 = scmp.lt.s32.totalorder %s354, 31
      %s356 = scalar_select %p355, %s354, 31
      %s357 = smul.addr %s356, 8
      %s358 = scalar_lea.vmem %s1, %s357
      %s359 = smul.u32 16, %s21
      %s360 = smul.u32 16, %s21
      %p361 = scmp.lt.s32.totalorder %s360, 31
      %s362 = scalar_select %p361, %s360, 31
      %s363 = smul.addr %s362, 8
      %s364 = scalar_lea.vmem %s8, %s363
      %s365 = smul.u32 16, %s21
      %s366 = smul.u32 16, %s21
      %p367 = scmp.lt.s32.totalorder %s366, 31
      %s368 = scalar_select %p367, %s366, 31
      %s369 = smul.addr %s368, 8
      %s370 = scalar_lea.vmem %s9, %s369
      %s371 = smul.u32 16, %s21
      %v372 = vld [vmem:[%s2] sm:$0xff]
      %v373 = vld [vmem:[%s2 + $0x8] sm:$0xff]
      %v374 = vld [vmem:[%s2 + $0x10] sm:$0xff]
      %v375 = vld [vmem:[%s3] sm:$0x1]
      %v376 = vld [vmem:[%s4] sm:$0xff]
      %v377 = vld [vmem:[%s4 + $0x8] sm:$0xff]
      %v378 = vld [vmem:[%s4 + $0x10] sm:$0xff]
      %v379 = vld [vmem:[%s4 + $0x18] sm:$0xff]
      %v380 = vld [vmem:[%s4 + $0x20] sm:$0xff]
      %v381 = vld [vmem:[%s4 + $0x28] sm:$0xff]
      %v382 = vld [vmem:[%s4 + $0x30] sm:$0xff]
      %v383 = vld [vmem:[%s4 + $0x38] sm:$0xff]
      %v384 = vld [vmem:[%s5] sm:$0x1]
      %v385 = vld [vmem:[%s6] sm:$0xff]
      %v386 = vld [vmem:[%s6 + $0x8] sm:$0xff]
      %v387 = vld [vmem:[%s6 + $0x10] sm:$0xff]
      %v388 = vld [vmem:[%s6 + $0x18] sm:$0xff]
      %v389 = vld [vmem:[%s7] sm:$0x1]
      %v390 = vld [vmem:[%s358] sm:$0xff]
      %v391 = vld [vmem:[%s358 + $0x8] sm:$0xff]
      %v392 = vld [vmem:[%s358 + $0x10] sm:$0xff]
      %v393 = vld [vmem:[%s358 + $0x18] sm:$0xff]
      %v394 = vld [vmem:[%s358 + $0x20] sm:$0xff]
      %v395 = vld [vmem:[%s358 + $0x28] sm:$0xff]
      %v396 = vld [vmem:[%s358 + $0x30] sm:$0xff]
      %v397 = vld [vmem:[%s358 + $0x38] sm:$0xff]
      %v398 = vld [vmem:[%s358 + $0x40] sm:$0xff]
      %v399 = vld [vmem:[%s358 + $0x48] sm:$0xff]
      %v400 = vld [vmem:[%s358 + $0x50] sm:$0xff]
      %v401 = vld [vmem:[%s358 + $0x58] sm:$0xff]
      %v402 = vld [vmem:[%s358 + $0x60] sm:$0xff]
      %v403 = vld [vmem:[%s358 + $0x68] sm:$0xff]
      %v404 = vld [vmem:[%s358 + $0x70] sm:$0xff]
      %v405 = vld [vmem:[%s358 + $0x78] sm:$0xff]
      %v406 = vld [vmem:[%s352] sm:$0xff]
      %v407 = vld [vmem:[%s352 + $0x8] sm:$0xff]
      %v408 = vld [vmem:[%s352 + $0x10] sm:$0xff]
      %v409 = vld [vmem:[%s352 + $0x18] sm:$0xff]
      %v410 = vld [vmem:[%s352 + $0x20] sm:$0xff]
      %v411 = vld [vmem:[%s352 + $0x28] sm:$0xff]
      %v412 = vld [vmem:[%s352 + $0x30] sm:$0xff]
      %v413 = vld [vmem:[%s352 + $0x38] sm:$0xff]
      %v414 = vld [vmem:[%s352 + $0x40] sm:$0xff]
      %v415 = vld [vmem:[%s352 + $0x48] sm:$0xff]
      %v416 = vld [vmem:[%s352 + $0x50] sm:$0xff]
      %v417 = vld [vmem:[%s352 + $0x58] sm:$0xff]
      %v418 = vld [vmem:[%s352 + $0x60] sm:$0xff]
      %v419 = vld [vmem:[%s352 + $0x68] sm:$0xff]
      %v420 = vld [vmem:[%s352 + $0x70] sm:$0xff]
      %v421 = vld [vmem:[%s352 + $0x78] sm:$0xff]
      %v423 = vlaneseq
      %v424 = vshrl.u32 %v423, 7
      %v425 = vsub.s32 0, %v424
      %v426 = vrot.slane %v375, %v425
      %vm428 = vcmask 195584
      %v430 = vsel %vm428, %v406, 0
      %v433 = vsel %vm428, %v407, 0
      %v436 = vsel %vm428, %v408, 0
      %v439 = vsel %vm428, %v409, 0
      %v442 = vsel %vm428, %v410, 0
      %v445 = vsel %vm428, %v411, 0
      %v448 = vsel %vm428, %v412, 0
      %v451 = vsel %vm428, %v413, 0
      %v454 = vsel %vm428, %v414, 0
      %v457 = vsel %vm428, %v415, 0
      %v460 = vsel %vm428, %v416, 0
      %v463 = vsel %vm428, %v417, 0
      %v466 = vsel %vm428, %v418, 0
      %v469 = vsel %vm428, %v419, 0
      %v472 = vsel %vm428, %v420, 0
      %v475 = vsel %vm428, %v421, 0
      %477 = vmatprep.subr.mxu0 0.0
      %478 = vmatpush1.msra.mxu0 %v372
      %479 = vmatprep.subr.mxu0 0.0
      %480 = vmatpush1.msra.mxu0 %v373
      %481 = vmatprep.subr.mxu0 0.0
      %482 = vmatpush1.msra.mxu0 %v374
      %483 = vmatprep.subr.mxu0 0.0
      %484 = vmatpush1.msra.mxu0 0.0
      %485 = vmatprep.subr.mxu0 0.0
      %486 = vmatpush1.msra.mxu0 0.0
      %487 = vmatprep.subr.mxu0 0.0
      %488 = vmatpush1.msra.mxu0 0.0
      %489 = vmatprep.subr.mxu0 0.0
      %490 = vmatpush1.msra.mxu0 0.0
      %491 = vmatprep.subr.mxu0 0.0
      %492 = vmatpush1.msra.mxu0 0.0
      %493 = vmatprep.subr.mxu0 0.0
      %494 = vmatpush1.msra.mxu0 0.0
      %495 = vmatprep.subr.mxu0 0.0
      %496 = vmatpush1.msra.mxu0 0.0
      %497 = vmatprep.subr.mxu0 0.0
      %498 = vmatpush1.msra.mxu0 0.0
      %499 = vmatprep.subr.mxu0 0.0
      %500 = vmatpush1.msra.mxu0 0.0
      %501 = vmatprep.subr.mxu0 0.0
      %502 = vmatpush1.msra.mxu0 0.0
      %503 = vmatprep.subr.mxu0 0.0
      %504 = vmatpush1.msra.mxu0 0.0
      %505 = vmatprep.subr.mxu0 0.0
      %506 = vmatpush1.msra.mxu0 0.0
      %507 = vmatprep.subr.mxu0 0.0
      %508 = vmatpush1.msra.mxu0 0.0
      %509 = vmatprep.subr.mxu0 0.0
      %510 = vmatpush1.msra.mxu0 0.0
      %511 = vmatprep.subr.mxu0 0.0
      %512 = vmatpush1.msra.mxu0 0.0
      %513 = vmatprep.subr.mxu0 0.0
      %514 = vmatpush1.msra.mxu0 0.0
      %515 = vmatprep.subr.mxu0 0.0
      %516 = vmatpush1.msra.mxu0 0.0
      %517 = vmatprep.subr.mxu0 0.0
      %518 = vmatpush1.msra.mxu0 0.0
      %519 = vmatprep.subr.mxu0 0.0
      %520 = vmatpush1.msra.mxu0 0.0
      %521 = vmatprep.subr.mxu0 0.0
      %522 = vmatpush1.msra.mxu0 0.0
      %523 = vmatprep.subr.mxu0 0.0
      %524 = vmatpush1.msra.mxu0 0.0
      %525 = vmatprep.subr.mxu0 0.0
      %526 = vmatpush1.msra.mxu0 0.0
      %527 = vmatprep.subr.mxu0 0.0
      %528 = vmatpush1.msra.mxu0 0.0
      %529 = vmatprep.subr.mxu0 0.0
      %530 = vmatpush1.msra.mxu0 0.0
      %531 = vmatprep.subr.mxu0 0.0
      %532 = vmatpush1.msra.mxu0 0.0
      %533 = vmatprep.subr.mxu0 0.0
      %534 = vmatpush1.msra.mxu0 0.0
      %535 = vmatprep.subr.mxu0 0.0
      %536 = vmatpush1.msra.mxu0 0.0
      %537 = vmatprep.subr.mxu0 0.0
      %538 = vmatpush1.msra.mxu0 0.0
      %539 = vmatprep.subr.mxu0 0.0
      %540 = vmatpush1.msra.mxu0 0.0
      %541 = vmatprep.mubr.f32.mxu0 0.0
      %542 = vmatmul.mubr.f32.gmra.mrb[0].mxu0 %v430
      %v543 = vpop.f32.mrb[0].mxu0
      %v544 = vadd.f32 %v426, %v543
      %v545 = vpop.f32.mrb[0].mxu0
      %546 = vmatprep.mubr.f32.mxu0 0.0
      %547 = vmatmul.mubr.f32.gmra.mrb[0].mxu0 %v433
      %v548 = vpop.f32.mrb[0].mxu0
      %v549 = vadd.f32 %v426, %v548
      %v550 = vpop.f32.mrb[0].mxu0
      %551 = vmatprep.mubr.f32.mxu0 0.0
      %552 = vmatmul.mubr.f32.gmra.mrb[0].mxu0 %v436
      %v553 = vpop.f32.mrb[0].mxu0
      %v554 = vadd.f32 %v426, %v553
      %v555 = vpop.f32.mrb[0].mxu0
      %556 = vmatprep.mubr.f32.mxu0 0.0
      %557 = vmatmul.mubr.f32.gmra.mrb[0].mxu0 %v439
      %v558 = vpop.f32.mrb[0].mxu0
      %v559 = vadd.f32 %v426, %v558
      %v560 = vpop.f32.mrb[0].mxu0
      %561 = vmatprep.mubr.f32.mxu0 0.0
      %562 = vmatmul.mubr.f32.gmra.mrb[0].mxu0 %v442
      %v563 = vpop.f32.mrb[0].mxu0
      %v564 = vadd.f32 %v426, %v563
      %v565 = vpop.f32.mrb[0].mxu0
      %566 = vmatprep.mubr.f32.mxu0 0.0
      %567 = vmatmul.mubr.f32.gmra.mrb[0].mxu0 %v445
      %v568 = vpop.f32.mrb[0].mxu0
      %v569 = vadd.f32 %v426, %v568
      %v570 = vpop.f32.mrb[0].mxu0
      %571 = vmatprep.mubr.f32.mxu0 0.0
      %572 = vmatmul.mubr.f32.gmra.mrb[0].mxu0 %v448
      %v573 = vpop.f32.mrb[0].mxu0
      %v574 = vadd.f32 %v426, %v573
      %v575 = vpop.f32.mrb[0].mxu0
      %576 = vmatprep.mubr.f32.mxu0 0.0
      %577 = vmatmul.mubr.f32.gmra.mrb[0].mxu0 %v451
      %v578 = vpop.f32.mrb[0].mxu0
      %v579 = vadd.f32 %v426, %v578
      %v580 = vpop.f32.mrb[0].mxu0
      %581 = vmatprep.mubr.f32.mxu0 0.0
      %582 = vmatmul.mubr.f32.gmra.mrb[0].mxu0 %v454
      %v583 = vpop.f32.mrb[0].mxu0
      %v584 = vadd.f32 %v426, %v583
      %v585 = vpop.f32.mrb[0].mxu0
      %586 = vmatprep.mubr.f32.mxu0 0.0
      %587 = vmatmul.mubr.f32.gmra.mrb[0].mxu0 %v457
      %v588 = vpop.f32.mrb[0].mxu0
      %v589 = vadd.f32 %v426, %v588
      %v590 = vpop.f32.mrb[0].mxu0
      %591 = vmatprep.mubr.f32.mxu0 0.0
      %592 = vmatmul.mubr.f32.gmra.mrb[0].mxu0 %v460
      %v593 = vpop.f32.mrb[0].mxu0
      %v594 = vadd.f32 %v426, %v593
      %v595 = vpop.f32.mrb[0].mxu0
      %596 = vmatprep.mubr.f32.mxu0 0.0
      %597 = vmatmul.mubr.f32.gmra.mrb[0].mxu0 %v463
      %v598 = vpop.f32.mrb[0].mxu0
      %v599 = vadd.f32 %v426, %v598
      %v600 = vpop.f32.mrb[0].mxu0
      %601 = vmatprep.mubr.f32.mxu0 0.0
      %602 = vmatmul.mubr.f32.gmra.mrb[0].mxu0 %v466
      %v603 = vpop.f32.mrb[0].mxu0
      %v604 = vadd.f32 %v426, %v603
      %v605 = vpop.f32.mrb[0].mxu0
      %606 = vmatprep.mubr.f32.mxu0 0.0
      %607 = vmatmul.mubr.f32.gmra.mrb[0].mxu0 %v469
      %v608 = vpop.f32.mrb[0].mxu0
      %v609 = vadd.f32 %v426, %v608
      %v610 = vpop.f32.mrb[0].mxu0
      %611 = vmatprep.mubr.f32.mxu0 0.0
      %612 = vmatmul.mubr.f32.gmra.mrb[0].mxu0 %v472
      %v613 = vpop.f32.mrb[0].mxu0
      %v614 = vadd.f32 %v426, %v613
      %v615 = vpop.f32.mrb[0].mxu0
      %616 = vmatprep.mubr.f32.mxu0 0.0
      %617 = vmatmul.mubr.f32.gmra.mrb[0].mxu0 %v475
      %v618 = vpop.f32.mrb[0].mxu0
      %v619 = vadd.f32 %v426, %v618
      %v620 = vpop.f32.mrb[0].mxu0
      %621 = vdwg.mxu0
      %v622 = vmax.f32 %v544, 0.0
      %v623 = vmax.f32 %v549, 0.0
      %v624 = vmax.f32 %v554, 0.0
      %v625 = vmax.f32 %v559, 0.0
      %v626 = vmax.f32 %v564, 0.0
      %v627 = vmax.f32 %v569, 0.0
      %v628 = vmax.f32 %v574, 0.0
      %v629 = vmax.f32 %v579, 0.0
      %v630 = vmax.f32 %v584, 0.0
      %v631 = vmax.f32 %v589, 0.0
      %v632 = vmax.f32 %v594, 0.0
      %v633 = vmax.f32 %v599, 0.0
      %v634 = vmax.f32 %v604, 0.0
      %v635 = vmax.f32 %v609, 0.0
      %v636 = vmax.f32 %v614, 0.0
      %v637 = vmax.f32 %v619, 0.0
      %654 = vrot.lane.b32.xlu0 %v390, 32
      %v655 = vpop.permute.xlu0 %654
      %656 = vrot.lane.b32.xlu0 %v391, 32
      %v657 = vpop.permute.xlu0 %656
      %658 = vrot.lane.b32.xlu0 %v392, 32
      %v659 = vpop.permute.xlu0 %658
      %660 = vrot.lane.b32.xlu0 %v393, 32
      %v661 = vpop.permute.xlu0 %660
      %662 = vrot.lane.b32.xlu0 %v394, 32
      %v663 = vpop.permute.xlu0 %662
      %664 = vrot.lane.b32.xlu0 %v395, 32
      %v665 = vpop.permute.xlu0 %664
      %666 = vrot.lane.b32.xlu0 %v396, 32
      %v667 = vpop.permute.xlu0 %666
      %668 = vrot.lane.b32.xlu0 %v397, 32
      %v669 = vpop.permute.xlu0 %668
      %670 = vrot.lane.b32.xlu0 %v398, 32
      %v671 = vpop.permute.xlu0 %670
      %672 = vrot.lane.b32.xlu0 %v399, 32
      %v673 = vpop.permute.xlu0 %672
      %674 = vrot.lane.b32.xlu0 %v400, 32
      %v675 = vpop.permute.xlu0 %674
      %676 = vrot.lane.b32.xlu0 %v401, 32
      %v677 = vpop.permute.xlu0 %676
      %678 = vrot.lane.b32.xlu0 %v402, 32
      %v679 = vpop.permute.xlu0 %678
      %680 = vrot.lane.b32.xlu0 %v403, 32
      %v681 = vpop.permute.xlu0 %680
      %682 = vrot.lane.b32.xlu0 %v404, 32
      %v683 = vpop.permute.xlu0 %682
      %684 = vrot.lane.b32.xlu0 %v405, 32
      %v685 = vpop.permute.xlu0 %684
      %vm702 = vcmask 261120
      %v703 = vsel %vm702, %v622, %v655
      %v704 = vsel %vm702, %v623, %v657
      %v705 = vsel %vm702, %v624, %v659
      %v706 = vsel %vm702, %v625, %v661
      %v707 = vsel %vm702, %v626, %v663
      %v708 = vsel %vm702, %v627, %v665
      %v709 = vsel %vm702, %v628, %v667
      %v710 = vsel %vm702, %v629, %v669
      %v711 = vsel %vm702, %v630, %v671
      %v712 = vsel %vm702, %v631, %v673
      %v713 = vsel %vm702, %v632, %v675
      %v714 = vsel %vm702, %v633, %v677
      %v715 = vsel %vm702, %v634, %v679
      %v716 = vsel %vm702, %v635, %v681
      %v717 = vsel %vm702, %v636, %v683
      %v718 = vsel %vm702, %v637, %v685
      %v720 = vlaneseq
      %v721 = vshrl.u32 %v720, 7
      %v722 = vsub.s32 0, %v721
      %v723 = vrot.slane %v384, %v722
      %vm725 = vcmask 523264
      %v727 = vsel %vm725, %v703, 0
      %v730 = vsel %vm725, %v704, 0
      %v733 = vsel %vm725, %v705, 0
      %v736 = vsel %vm725, %v706, 0
      %v739 = vsel %vm725, %v707, 0
      %v742 = vsel %vm725, %v708, 0
      %v745 = vsel %vm725, %v709, 0
      %v748 = vsel %vm725, %v710, 0
      %v751 = vsel %vm725, %v711, 0
      %v754 = vsel %vm725, %v712, 0
      %v757 = vsel %vm725, %v713, 0
      %v760 = vsel %vm725, %v714, 0
      %v763 = vsel %vm725, %v715, 0
      %v766 = vsel %vm725, %v716, 0
      %v769 = vsel %vm725, %v717, 0
      %v772 = vsel %vm725, %v718, 0
      %774 = vmatprep.subr.mxu0 0.0
      %775 = vmatpush1.msra.mxu0 %v376
      %776 = vmatprep.subr.mxu0 0.0
      %777 = vmatpush1.msra.mxu0 %v377
      %778 = vmatprep.subr.mxu0 0.0
      %779 = vmatpush1.msra.mxu0 %v378
      %780 = vmatprep.subr.mxu0 0.0
      %781 = vmatpush1.msra.mxu0 %v379
      %782 = vmatprep.subr.mxu0 0.0
      %783 = vmatpush1.msra.mxu0 %v380
      %784 = vmatprep.subr.mxu0 0.0
      %785 = vmatpush1.msra.mxu0 %v381
      %786 = vmatprep.subr.mxu0 0.0
      %787 = vmatpush1.msra.mxu0 %v382
      %788 = vmatprep.subr.mxu0 0.0
      %789 = vmatpush1.msra.mxu0 %v383
      %790 = vmatprep.subr.mxu0 0.0
      %791 = vmatpush1.msra.mxu0 0.0
      %792 = vmatprep.subr.mxu0 0.0
      %793 = vmatpush1.msra.mxu0 0.0
      %794 = vmatprep.subr.mxu0 0.0
      %795 = vmatpush1.msra.mxu0 0.0
      %796 = vmatprep.subr.mxu0 0.0
      %797 = vmatpush1.msra.mxu0 0.0
      %798 = vmatprep.subr.mxu0 0.0
      %799 = vmatpush1.msra.mxu0 0.0
      %800 = vmatprep.subr.mxu0 0.0
      %801 = vmatpush1.msra.mxu0 0.0
      %802 = vmatprep.subr.mxu0 0.0
      %803 = vmatpush1.msra.mxu0 0.0
      %804 = vmatprep.subr.mxu0 0.0
      %805 = vmatpush1.msra.mxu0 0.0
      %806 = vmatprep.subr.mxu0 0.0
      %807 = vmatpush1.msra.mxu0 0.0
      %808 = vmatprep.subr.mxu0 0.0
      %809 = vmatpush1.msra.mxu0 0.0
      %810 = vmatprep.subr.mxu0 0.0
      %811 = vmatpush1.msra.mxu0 0.0
      %812 = vmatprep.subr.mxu0 0.0
      %813 = vmatpush1.msra.mxu0 0.0
      %814 = vmatprep.subr.mxu0 0.0
      %815 = vmatpush1.msra.mxu0 0.0
      %816 = vmatprep.subr.mxu0 0.0
      %817 = vmatpush1.msra.mxu0 0.0
      %818 = vmatprep.subr.mxu0 0.0
      %819 = vmatpush1.msra.mxu0 0.0
      %820 = vmatprep.subr.mxu0 0.0
      %821 = vmatpush1.msra.mxu0 0.0
      %822 = vmatprep.subr.mxu0 0.0
      %823 = vmatpush1.msra.mxu0 0.0
      %824 = vmatprep.subr.mxu0 0.0
      %825 = vmatpush1.msra.mxu0 0.0
      %826 = vmatprep.subr.mxu0 0.0
      %827 = vmatpush1.msra.mxu0 0.0
      %828 = vmatprep.subr.mxu0 0.0
      %829 = vmatpush1.msra.mxu0 0.0
      %830 = vmatprep.subr.mxu0 0.0
      %831 = vmatpush1.msra.mxu0 0.0
      %832 = vmatprep.subr.mxu0 0.0
      %833 = vmatpush1.msra.mxu0 0.0
      %834 = vmatprep.subr.mxu0 0.0
      %835 = vmatpush1.msra.mxu0 0.0
      %836 = vmatprep.subr.mxu0 0.0
      %837 = vmatpush1.msra.mxu0 0.0
      %838 = vmatprep.mubr.f32.mxu0 0.0
      %839 = vmatmul.mubr.f32.gmra.mrb[0].mxu0 %v727
      %v840 = vpop.f32.mrb[0].mxu0
      %v841 = vadd.f32 %v723, %v840
      %v842 = vpop.f32.mrb[0].mxu0
      %843 = vmatprep.mubr.f32.mxu0 0.0
      %844 = vmatmul.mubr.f32.gmra.mrb[0].mxu0 %v730
      %v845 = vpop.f32.mrb[0].mxu0
      %v846 = vadd.f32 %v723, %v845
      %v847 = vpop.f32.mrb[0].mxu0
      %848 = vmatprep.mubr.f32.mxu0 0.0
      %849 = vmatmul.mubr.f32.gmra.mrb[0].mxu0 %v733
      %v850 = vpop.f32.mrb[0].mxu0
      %v851 = vadd.f32 %v723, %v850
      %v852 = vpop.f32.mrb[0].mxu0
      %853 = vmatprep.mubr.f32.mxu0 0.0
      %854 = vmatmul.mubr.f32.gmra.mrb[0].mxu0 %v736
      %v855 = vpop.f32.mrb[0].mxu0
      %v856 = vadd.f32 %v723, %v855
      %v857 = vpop.f32.mrb[0].mxu0
      %858 = vmatprep.mubr.f32.mxu0 0.0
      %859 = vmatmul.mubr.f32.gmra.mrb[0].mxu0 %v739
      %v860 = vpop.f32.mrb[0].mxu0
      %v861 = vadd.f32 %v723, %v860
      %v862 = vpop.f32.mrb[0].mxu0
      %863 = vmatprep.mubr.f32.mxu0 0.0
      %864 = vmatmul.mubr.f32.gmra.mrb[0].mxu0 %v742
      %v865 = vpop.f32.mrb[0].mxu0
      %v866 = vadd.f32 %v723, %v865
      %v867 = vpop.f32.mrb[0].mxu0
      %868 = vmatprep.mubr.f32.mxu0 0.0
      %869 = vmatmul.mubr.f32.gmra.mrb[0].mxu0 %v745
      %v870 = vpop.f32.mrb[0].mxu0
      %v871 = vadd.f32 %v723, %v870
      %v872 = vpop.f32.mrb[0].mxu0
      %873 = vmatprep.mubr.f32.mxu0 0.0
      %874 = vmatmul.mubr.f32.gmra.mrb[0].mxu0 %v748
      %v875 = vpop.f32.mrb[0].mxu0
      %v876 = vadd.f32 %v723, %v875
      %v877 = vpop.f32.mrb[0].mxu0
      %878 = vmatprep.mubr.f32.mxu0 0.0
      %879 = vmatmul.mubr.f32.gmra.mrb[0].mxu0 %v751
      %v880 = vpop.f32.mrb[0].mxu0
      %v881 = vadd.f32 %v723, %v880
      %v882 = vpop.f32.mrb[0].mxu0
      %883 = vmatprep.mubr.f32.mxu0 0.0
      %884 = vmatmul.mubr.f32.gmra.mrb[0].mxu0 %v754
      %v885 = vpop.f32.mrb[0].mxu0
      %v886 = vadd.f32 %v723, %v885
      %v887 = vpop.f32.mrb[0].mxu0
      %888 = vmatprep.mubr.f32.mxu0 0.0
      %889 = vmatmul.mubr.f32.gmra.mrb[0].mxu0 %v757
      %v890 = vpop.f32.mrb[0].mxu0
      %v891 = vadd.f32 %v723, %v890
      %v892 = vpop.f32.mrb[0].mxu0
      %893 = vmatprep.mubr.f32.mxu0 0.0
      %894 = vmatmul.mubr.f32.gmra.mrb[0].mxu0 %v760
      %v895 = vpop.f32.mrb[0].mxu0
      %v896 = vadd.f32 %v723, %v895
      %v897 = vpop.f32.mrb[0].mxu0
      %898 = vmatprep.mubr.f32.mxu0 0.0
      %899 = vmatmul.mubr.f32.gmra.mrb[0].mxu0 %v763
      %v900 = vpop.f32.mrb[0].mxu0
      %v901 = vadd.f32 %v723, %v900
      %v902 = vpop.f32.mrb[0].mxu0
      %903 = vmatprep.mubr.f32.mxu0 0.0
      %904 = vmatmul.mubr.f32.gmra.mrb[0].mxu0 %v766
      %v905 = vpop.f32.mrb[0].mxu0
      %v906 = vadd.f32 %v723, %v905
      %v907 = vpop.f32.mrb[0].mxu0
      %908 = vmatprep.mubr.f32.mxu0 0.0
      %909 = vmatmul.mubr.f32.gmra.mrb[0].mxu0 %v769
      %v910 = vpop.f32.mrb[0].mxu0
      %v911 = vadd.f32 %v723, %v910
      %v912 = vpop.f32.mrb[0].mxu0
      %913 = vmatprep.mubr.f32.mxu0 0.0
      %914 = vmatmul.mubr.f32.gmra.mrb[0].mxu0 %v772
      %v915 = vpop.f32.mrb[0].mxu0
      %v916 = vadd.f32 %v723, %v915
      %v917 = vpop.f32.mrb[0].mxu0
      %918 = vdwg.mxu0
      %v919 = vxor.u32 %v841, 2147483648
      %v920 = vxor.u32 %v846, 2147483648
      %v921 = vxor.u32 %v851, 2147483648
      %v922 = vxor.u32 %v856, 2147483648
      %v923 = vxor.u32 %v861, 2147483648
      %v924 = vxor.u32 %v866, 2147483648
      %v925 = vxor.u32 %v871, 2147483648
      %v926 = vxor.u32 %v876, 2147483648
      %v927 = vxor.u32 %v881, 2147483648
      %v928 = vxor.u32 %v886, 2147483648
      %v929 = vxor.u32 %v891, 2147483648
      %v930 = vxor.u32 %v896, 2147483648
      %v931 = vxor.u32 %v901, 2147483648
      %v932 = vxor.u32 %v906, 2147483648
      %v933 = vxor.u32 %v911, 2147483648
      %v934 = vxor.u32 %v916, 2147483648
      %v935 = vmul.f32 %v919, 1.442695
      %v936 = vpow.pop %v935
      %v937 = vmul.f32 %v920, 1.442695
      %v938 = vpow.pop %v937
      %v939 = vmul.f32 %v921, 1.442695
      %v940 = vpow.pop %v939
      %v941 = vmul.f32 %v922, 1.442695
      %v942 = vpow.pop %v941
      %v943 = vmul.f32 %v923, 1.442695
      %v944 = vpow.pop %v943
      %v945 = vmul.f32 %v924, 1.442695
      %v946 = vpow.pop %v945
      %v947 = vmul.f32 %v925, 1.442695
      %v948 = vpow.pop %v947
      %v949 = vmul.f32 %v926, 1.442695
      %v950 = vpow.pop %v949
      %v951 = vmul.f32 %v927, 1.442695
      %v952 = vpow.pop %v951
      %v953 = vmul.f32 %v928, 1.442695
      %v954 = vpow.pop %v953
      %v955 = vmul.f32 %v929, 1.442695
      %v956 = vpow.pop %v955
      %v957 = vmul.f32 %v930, 1.442695
      %v958 = vpow.pop %v957
      %v959 = vmul.f32 %v931, 1.442695
      %v960 = vpow.pop %v959
      %v961 = vmul.f32 %v932, 1.442695
      %v962 = vpow.pop %v961
      %v963 = vmul.f32 %v933, 1.442695
      %v964 = vpow.pop %v963
      %v965 = vmul.f32 %v934, 1.442695
      %v966 = vpow.pop %v965
      %v967 = vadd.f32 %v936, 1.0
      %v968 = vadd.f32 %v938, 1.0
      %v969 = vadd.f32 %v940, 1.0
      %v970 = vadd.f32 %v942, 1.0
      %v971 = vadd.f32 %v944, 1.0
      %v972 = vadd.f32 %v946, 1.0
      %v973 = vadd.f32 %v948, 1.0
      %v974 = vadd.f32 %v950, 1.0
      %v975 = vadd.f32 %v952, 1.0
      %v976 = vadd.f32 %v954, 1.0
      %v977 = vadd.f32 %v956, 1.0
      %v978 = vadd.f32 %v958, 1.0
      %v979 = vadd.f32 %v960, 1.0
      %v980 = vadd.f32 %v962, 1.0
      %v981 = vadd.f32 %v964, 1.0
      %v982 = vadd.f32 %v966, 1.0
      %v983 = vrcp.pop %v967
      %v984 = vmul.f32 1.0, %v983
      %v985 = vrcp.pop %v968
      %v986 = vmul.f32 1.0, %v985
      %v987 = vrcp.pop %v969
      %v988 = vmul.f32 1.0, %v987
      %v989 = vrcp.pop %v970
      %v990 = vmul.f32 1.0, %v989
      %v991 = vrcp.pop %v971
      %v992 = vmul.f32 1.0, %v991
      %v993 = vrcp.pop %v972
      %v994 = vmul.f32 1.0, %v993
      %v995 = vrcp.pop %v973
      %v996 = vmul.f32 1.0, %v995
      %v997 = vrcp.pop %v974
      %v998 = vmul.f32 1.0, %v997
      %v999 = vrcp.pop %v975
      %v1000 = vmul.f32 1.0, %v999
      %v1001 = vrcp.pop %v976
      %v1002 = vmul.f32 1.0, %v1001
      %v1003 = vrcp.pop %v977
      %v1004 = vmul.f32 1.0, %v1003
      %v1005 = vrcp.pop %v978
      %v1006 = vmul.f32 1.0, %v1005
      %v1007 = vrcp.pop %v979
      %v1008 = vmul.f32 1.0, %v1007
      %v1009 = vrcp.pop %v980
      %v1010 = vmul.f32 1.0, %v1009
      %v1011 = vrcp.pop %v981
      %v1012 = vmul.f32 1.0, %v1011
      %v1013 = vrcp.pop %v982
      %v1014 = vmul.f32 1.0, %v1013
      %1031 = vrot.lane.b32.xlu0 %v841, 32
      %v1032 = vpop.permute.xlu0 %1031
      %1033 = vrot.lane.b32.xlu0 %v846, 32
      %v1034 = vpop.permute.xlu0 %1033
      %1035 = vrot.lane.b32.xlu0 %v851, 32
      %v1036 = vpop.permute.xlu0 %1035
      %1037 = vrot.lane.b32.xlu0 %v856, 32
      %v1038 = vpop.permute.xlu0 %1037
      %1039 = vrot.lane.b32.xlu0 %v861, 32
      %v1040 = vpop.permute.xlu0 %1039
      %1041 = vrot.lane.b32.xlu0 %v866, 32
      %v1042 = vpop.permute.xlu0 %1041
      %1043 = vrot.lane.b32.xlu0 %v871, 32
      %v1044 = vpop.permute.xlu0 %1043
      %1045 = vrot.lane.b32.xlu0 %v876, 32
      %v1046 = vpop.permute.xlu0 %1045
      %1047 = vrot.lane.b32.xlu0 %v881, 32
      %v1048 = vpop.permute.xlu0 %1047
      %1049 = vrot.lane.b32.xlu0 %v886, 32
      %v1050 = vpop.permute.xlu0 %1049
      %1051 = vrot.lane.b32.xlu0 %v891, 32
      %v1052 = vpop.permute.xlu0 %1051
      %1053 = vrot.lane.b32.xlu0 %v896, 32
      %v1054 = vpop.permute.xlu0 %1053
      %1055 = vrot.lane.b32.xlu0 %v901, 32
      %v1056 = vpop.permute.xlu0 %1055
      %1057 = vrot.lane.b32.xlu0 %v906, 32
      %v1058 = vpop.permute.xlu0 %1057
      %1059 = vrot.lane.b32.xlu0 %v911, 32
      %v1060 = vpop.permute.xlu0 %1059
      %1061 = vrot.lane.b32.xlu0 %v916, 32
      %v1062 = vpop.permute.xlu0 %1061
      %v1079 = vmul.f32 %v984, %v1032
      %v1080 = vmul.f32 %v986, %v1034
      %v1081 = vmul.f32 %v988, %v1036
      %v1082 = vmul.f32 %v990, %v1038
      %v1083 = vmul.f32 %v992, %v1040
      %v1084 = vmul.f32 %v994, %v1042
      %v1085 = vmul.f32 %v996, %v1044
      %v1086 = vmul.f32 %v998, %v1046
      %v1087 = vmul.f32 %v1000, %v1048
      %v1088 = vmul.f32 %v1002, %v1050
      %v1089 = vmul.f32 %v1004, %v1052
      %v1090 = vmul.f32 %v1006, %v1054
      %v1091 = vmul.f32 %v1008, %v1056
      %v1092 = vmul.f32 %v1010, %v1058
      %v1093 = vmul.f32 %v1012, %v1060
      %v1094 = vmul.f32 %v1014, %v1062
      %1111 = vrot.lane.b32.xlu0 %v1079, 64
      %v1112 = vpop.permute.xlu0 %1111
      %1113 = vrot.lane.b32.xlu0 %v1080, 64
      %v1114 = vpop.permute.xlu0 %1113
      %1115 = vrot.lane.b32.xlu0 %v1081, 64
      %v1116 = vpop.permute.xlu0 %1115
      %1117 = vrot.lane.b32.xlu0 %v1082, 64
      %v1118 = vpop.permute.xlu0 %1117
      %1119 = vrot.lane.b32.xlu0 %v1083, 64
      %v1120 = vpop.permute.xlu0 %1119
      %1121 = vrot.lane.b32.xlu0 %v1084, 64
      %v1122 = vpop.permute.xlu0 %1121
      %1123 = vrot.lane.b32.xlu0 %v1085, 64
      %v1124 = vpop.permute.xlu0 %1123
      %1125 = vrot.lane.b32.xlu0 %v1086, 64
      %v1126 = vpop.permute.xlu0 %1125
      %1127 = vrot.lane.b32.xlu0 %v1087, 64
      %v1128 = vpop.permute.xlu0 %1127
      %1129 = vrot.lane.b32.xlu0 %v1088, 64
      %v1130 = vpop.permute.xlu0 %1129
      %1131 = vrot.lane.b32.xlu0 %v1089, 64
      %v1132 = vpop.permute.xlu0 %1131
      %1133 = vrot.lane.b32.xlu0 %v1090, 64
      %v1134 = vpop.permute.xlu0 %1133
      %1135 = vrot.lane.b32.xlu0 %v1091, 64
      %v1136 = vpop.permute.xlu0 %1135
      %1137 = vrot.lane.b32.xlu0 %v1092, 64
      %v1138 = vpop.permute.xlu0 %1137
      %1139 = vrot.lane.b32.xlu0 %v1093, 64
      %v1140 = vpop.permute.xlu0 %1139
      %1141 = vrot.lane.b32.xlu0 %v1094, 64
      %v1142 = vpop.permute.xlu0 %1141
      %v1159 = vadd.f32 %v841, %v1112
      %v1160 = vadd.f32 %v846, %v1114
      %v1161 = vadd.f32 %v851, %v1116
      %v1162 = vadd.f32 %v856, %v1118
      %v1163 = vadd.f32 %v861, %v1120
      %v1164 = vadd.f32 %v866, %v1122
      %v1165 = vadd.f32 %v871, %v1124
      %v1166 = vadd.f32 %v876, %v1126
      %v1167 = vadd.f32 %v881, %v1128
      %v1168 = vadd.f32 %v886, %v1130
      %v1169 = vadd.f32 %v891, %v1132
      %v1170 = vadd.f32 %v896, %v1134
      %v1171 = vadd.f32 %v901, %v1136
      %v1172 = vadd.f32 %v906, %v1138
      %v1173 = vadd.f32 %v911, %v1140
      %v1174 = vadd.f32 %v916, %v1142
      %v1175 = vtanh.pop %v1159
      %v1176 = vtanh.pop %v1160
      %v1177 = vtanh.pop %v1161
      %v1178 = vtanh.pop %v1162
      %v1179 = vtanh.pop %v1163
      %v1180 = vtanh.pop %v1164
      %v1181 = vtanh.pop %v1165
      %v1182 = vtanh.pop %v1166
      %v1183 = vtanh.pop %v1167
      %v1184 = vtanh.pop %v1168
      %v1185 = vtanh.pop %v1169
      %v1186 = vtanh.pop %v1170
      %v1187 = vtanh.pop %v1171
      %v1188 = vtanh.pop %v1172
      %v1189 = vtanh.pop %v1173
      %v1190 = vtanh.pop %v1174
      %v1191 = vsub.f32 1.0, %v984
      %v1192 = vsub.f32 1.0, %v986
      %v1193 = vsub.f32 1.0, %v988
      %v1194 = vsub.f32 1.0, %v990
      %v1195 = vsub.f32 1.0, %v992
      %v1196 = vsub.f32 1.0, %v994
      %v1197 = vsub.f32 1.0, %v996
      %v1198 = vsub.f32 1.0, %v998
      %v1199 = vsub.f32 1.0, %v1000
      %v1200 = vsub.f32 1.0, %v1002
      %v1201 = vsub.f32 1.0, %v1004
      %v1202 = vsub.f32 1.0, %v1006
      %v1203 = vsub.f32 1.0, %v1008
      %v1204 = vsub.f32 1.0, %v1010
      %v1205 = vsub.f32 1.0, %v1012
      %v1206 = vsub.f32 1.0, %v1014
      %1223 = vrot.lane.b32.xlu0 %v1175, 96
      %v1224 = vpop.permute.xlu0 %1223
      %1225 = vrot.lane.b32.xlu0 %v1176, 96
      %v1226 = vpop.permute.xlu0 %1225
      %1227 = vrot.lane.b32.xlu0 %v1177, 96
      %v1228 = vpop.permute.xlu0 %1227
      %1229 = vrot.lane.b32.xlu0 %v1178, 96
      %v1230 = vpop.permute.xlu0 %1229
      %1231 = vrot.lane.b32.xlu0 %v1179, 96
      %v1232 = vpop.permute.xlu0 %1231
      %1233 = vrot.lane.b32.xlu0 %v1180, 96
      %v1234 = vpop.permute.xlu0 %1233
      %1235 = vrot.lane.b32.xlu0 %v1181, 96
      %v1236 = vpop.permute.xlu0 %1235
      %1237 = vrot.lane.b32.xlu0 %v1182, 96
      %v1238 = vpop.permute.xlu0 %1237
      %1239 = vrot.lane.b32.xlu0 %v1183, 96
      %v1240 = vpop.permute.xlu0 %1239
      %1241 = vrot.lane.b32.xlu0 %v1184, 96
      %v1242 = vpop.permute.xlu0 %1241
      %1243 = vrot.lane.b32.xlu0 %v1185, 96
      %v1244 = vpop.permute.xlu0 %1243
      %1245 = vrot.lane.b32.xlu0 %v1186, 96
      %v1246 = vpop.permute.xlu0 %1245
      %1247 = vrot.lane.b32.xlu0 %v1187, 96
      %v1248 = vpop.permute.xlu0 %1247
      %1249 = vrot.lane.b32.xlu0 %v1188, 96
      %v1250 = vpop.permute.xlu0 %1249
      %1251 = vrot.lane.b32.xlu0 %v1189, 96
      %v1252 = vpop.permute.xlu0 %1251
      %1253 = vrot.lane.b32.xlu0 %v1190, 96
      %v1254 = vpop.permute.xlu0 %1253
      %v1271 = vmul.f32 %v1191, %v1224
      %v1272 = vmul.f32 %v1192, %v1226
      %v1273 = vmul.f32 %v1193, %v1228
      %v1274 = vmul.f32 %v1194, %v1230
      %v1275 = vmul.f32 %v1195, %v1232
      %v1276 = vmul.f32 %v1196, %v1234
      %v1277 = vmul.f32 %v1197, %v1236
      %v1278 = vmul.f32 %v1198, %v1238
      %v1279 = vmul.f32 %v1199, %v1240
      %v1280 = vmul.f32 %v1200, %v1242
      %v1281 = vmul.f32 %v1201, %v1244
      %v1282 = vmul.f32 %v1202, %v1246
      %v1283 = vmul.f32 %v1203, %v1248
      %v1284 = vmul.f32 %v1204, %v1250
      %v1285 = vmul.f32 %v1205, %v1252
      %v1286 = vmul.f32 %v1206, %v1254
      %v1287 = vmul.f32 %v984, %v655
      %v1288 = vmul.f32 %v986, %v657
      %v1289 = vmul.f32 %v988, %v659
      %v1290 = vmul.f32 %v990, %v661
      %v1291 = vmul.f32 %v992, %v663
      %v1292 = vmul.f32 %v994, %v665
      %v1293 = vmul.f32 %v996, %v667
      %v1294 = vmul.f32 %v998, %v669
      %v1295 = vmul.f32 %v1000, %v671
      %v1296 = vmul.f32 %v1002, %v673
      %v1297 = vmul.f32 %v1004, %v675
      %v1298 = vmul.f32 %v1006, %v677
      %v1299 = vmul.f32 %v1008, %v679
      %v1300 = vmul.f32 %v1010, %v681
      %v1301 = vmul.f32 %v1012, %v683
      %v1302 = vmul.f32 %v1014, %v685
      %v1303 = vadd.f32 %v1271, %v1287
      %v1304 = vadd.f32 %v1272, %v1288
      %v1305 = vadd.f32 %v1273, %v1289
      %v1306 = vadd.f32 %v1274, %v1290
      %v1307 = vadd.f32 %v1275, %v1291
      %v1308 = vadd.f32 %v1276, %v1292
      %v1309 = vadd.f32 %v1277, %v1293
      %v1310 = vadd.f32 %v1278, %v1294
      %v1311 = vadd.f32 %v1279, %v1295
      %v1312 = vadd.f32 %v1280, %v1296
      %v1313 = vadd.f32 %v1281, %v1297
      %v1314 = vadd.f32 %v1282, %v1298
      %v1315 = vadd.f32 %v1283, %v1299
      %v1316 = vadd.f32 %v1284, %v1300
      %v1317 = vadd.f32 %v1285, %v1301
      %v1318 = vadd.f32 %v1286, %v1302
      %v1320 = vlaneseq
      %v1321 = vshrl.u32 %v1320, 7
      %v1322 = vsub.s32 0, %v1321
      %v1323 = vrot.slane %v389, %v1322
      %1341 = vrot.lane.b32.xlu0 %v1303, 96
      %v1342 = vpop.permute.xlu0 %1341
      %1343 = vrot.lane.b32.xlu0 %v1304, 96
      %v1344 = vpop.permute.xlu0 %1343
      %1345 = vrot.lane.b32.xlu0 %v1305, 96
      %v1346 = vpop.permute.xlu0 %1345
      %1347 = vrot.lane.b32.xlu0 %v1306, 96
      %v1348 = vpop.permute.xlu0 %1347
      %1349 = vrot.lane.b32.xlu0 %v1307, 96
      %v1350 = vpop.permute.xlu0 %1349
      %1351 = vrot.lane.b32.xlu0 %v1308, 96
      %v1352 = vpop.permute.xlu0 %1351
      %1353 = vrot.lane.b32.xlu0 %v1309, 96
      %v1354 = vpop.permute.xlu0 %1353
      %1355 = vrot.lane.b32.xlu0 %v1310, 96
      %v1356 = vpop.permute.xlu0 %1355
      %1357 = vrot.lane.b32.xlu0 %v1311, 96
      %v1358 = vpop.permute.xlu0 %1357
      %1359 = vrot.lane.b32.xlu0 %v1312, 96
      %v1360 = vpop.permute.xlu0 %1359
      %1361 = vrot.lane.b32.xlu0 %v1313, 96
      %v1362 = vpop.permute.xlu0 %1361
      %1363 = vrot.lane.b32.xlu0 %v1314, 96
      %v1364 = vpop.permute.xlu0 %1363
      %1365 = vrot.lane.b32.xlu0 %v1315, 96
      %v1366 = vpop.permute.xlu0 %1365
      %1367 = vrot.lane.b32.xlu0 %v1316, 96
      %v1368 = vpop.permute.xlu0 %1367
      %1369 = vrot.lane.b32.xlu0 %v1317, 96
      %v1370 = vpop.permute.xlu0 %1369
      %1371 = vrot.lane.b32.xlu0 %v1318, 96
      %v1372 = vpop.permute.xlu0 %1371
      %v1373 = vsel %vm702, %v1342, 0
      %v1375 = vsel %vm702, %v1344, 0
      %v1377 = vsel %vm702, %v1346, 0
      %v1379 = vsel %vm702, %v1348, 0
      %v1381 = vsel %vm702, %v1350, 0
      %v1383 = vsel %vm702, %v1352, 0
      %v1385 = vsel %vm702, %v1354, 0
      %v1387 = vsel %vm702, %v1356, 0
      %v1389 = vsel %vm702, %v1358, 0
      %v1391 = vsel %vm702, %v1360, 0
      %v1393 = vsel %vm702, %v1362, 0
      %v1395 = vsel %vm702, %v1364, 0
      %v1397 = vsel %vm702, %v1366, 0
      %v1399 = vsel %vm702, %v1368, 0
      %v1401 = vsel %vm702, %v1370, 0
      %v1403 = vsel %vm702, %v1372, 0
      %1405 = vmatprep.subr.mxu0 0.0
      %1406 = vmatpush1.msra.mxu0 %v385
      %1407 = vmatprep.subr.mxu0 0.0
      %1408 = vmatpush1.msra.mxu0 %v386
      %1409 = vmatprep.subr.mxu0 0.0
      %1410 = vmatpush1.msra.mxu0 %v387
      %1411 = vmatprep.subr.mxu0 0.0
      %1412 = vmatpush1.msra.mxu0 %v388
      %1413 = vmatprep.subr.mxu0 0.0
      %1414 = vmatpush1.msra.mxu0 0.0
      %1415 = vmatprep.subr.mxu0 0.0
      %1416 = vmatpush1.msra.mxu0 0.0
      %1417 = vmatprep.subr.mxu0 0.0
      %1418 = vmatpush1.msra.mxu0 0.0
      %1419 = vmatprep.subr.mxu0 0.0
      %1420 = vmatpush1.msra.mxu0 0.0
      %1421 = vmatprep.subr.mxu0 0.0
      %1422 = vmatpush1.msra.mxu0 0.0
      %1423 = vmatprep.subr.mxu0 0.0
      %1424 = vmatpush1.msra.mxu0 0.0
      %1425 = vmatprep.subr.mxu0 0.0
      %1426 = vmatpush1.msra.mxu0 0.0
      %1427 = vmatprep.subr.mxu0 0.0
      %1428 = vmatpush1.msra.mxu0 0.0
      %1429 = vmatprep.subr.mxu0 0.0
      %1430 = vmatpush1.msra.mxu0 0.0
      %1431 = vmatprep.subr.mxu0 0.0
      %1432 = vmatpush1.msra.mxu0 0.0
      %1433 = vmatprep.subr.mxu0 0.0
      %1434 = vmatpush1.msra.mxu0 0.0
      %1435 = vmatprep.subr.mxu0 0.0
      %1436 = vmatpush1.msra.mxu0 0.0
      %1437 = vmatprep.subr.mxu0 0.0
      %1438 = vmatpush1.msra.mxu0 0.0
      %1439 = vmatprep.subr.mxu0 0.0
      %1440 = vmatpush1.msra.mxu0 0.0
      %1441 = vmatprep.subr.mxu0 0.0
      %1442 = vmatpush1.msra.mxu0 0.0
      %1443 = vmatprep.subr.mxu0 0.0
      %1444 = vmatpush1.msra.mxu0 0.0
      %1445 = vmatprep.subr.mxu0 0.0
      %1446 = vmatpush1.msra.mxu0 0.0
      %1447 = vmatprep.subr.mxu0 0.0
      %1448 = vmatpush1.msra.mxu0 0.0
      %1449 = vmatprep.subr.mxu0 0.0
      %1450 = vmatpush1.msra.mxu0 0.0
      %1451 = vmatprep.subr.mxu0 0.0
      %1452 = vmatpush1.msra.mxu0 0.0
      %1453 = vmatprep.subr.mxu0 0.0
      %1454 = vmatpush1.msra.mxu0 0.0
      %1455 = vmatprep.subr.mxu0 0.0
      %1456 = vmatpush1.msra.mxu0 0.0
      %1457 = vmatprep.subr.mxu0 0.0
      %1458 = vmatpush1.msra.mxu0 0.0
      %1459 = vmatprep.subr.mxu0 0.0
      %1460 = vmatpush1.msra.mxu0 0.0
      %1461 = vmatprep.subr.mxu0 0.0
      %1462 = vmatpush1.msra.mxu0 0.0
      %1463 = vmatprep.subr.mxu0 0.0
      %1464 = vmatpush1.msra.mxu0 0.0
      %1465 = vmatprep.subr.mxu0 0.0
      %1466 = vmatpush1.msra.mxu0 0.0
      %1467 = vmatprep.subr.mxu0 0.0
      %1468 = vmatpush1.msra.mxu0 0.0
      %1469 = vmatprep.mubr.f32.mxu0 0.0
      %1470 = vmatmul.mubr.f32.gmra.mrb[0].mxu0 %v1373
      %v1471 = vpop.f32.mrb[0].mxu0
      %v1472 = vadd.f32 %v1323, %v1471
      %v1473 = vpop.f32.mrb[0].mxu0
      %1474 = vmatprep.mubr.f32.mxu0 0.0
      %1475 = vmatmul.mubr.f32.gmra.mrb[0].mxu0 %v1375
      %v1476 = vpop.f32.mrb[0].mxu0
      %v1477 = vadd.f32 %v1323, %v1476
      %v1478 = vpop.f32.mrb[0].mxu0
      %1479 = vmatprep.mubr.f32.mxu0 0.0
      %1480 = vmatmul.mubr.f32.gmra.mrb[0].mxu0 %v1377
      %v1481 = vpop.f32.mrb[0].mxu0
      %v1482 = vadd.f32 %v1323, %v1481
      %v1483 = vpop.f32.mrb[0].mxu0
      %1484 = vmatprep.mubr.f32.mxu0 0.0
      %1485 = vmatmul.mubr.f32.gmra.mrb[0].mxu0 %v1379
      %v1486 = vpop.f32.mrb[0].mxu0
      %v1487 = vadd.f32 %v1323, %v1486
      %v1488 = vpop.f32.mrb[0].mxu0
      %1489 = vmatprep.mubr.f32.mxu0 0.0
      %1490 = vmatmul.mubr.f32.gmra.mrb[0].mxu0 %v1381
      %v1491 = vpop.f32.mrb[0].mxu0
      %v1492 = vadd.f32 %v1323, %v1491
      %v1493 = vpop.f32.mrb[0].mxu0
      %1494 = vmatprep.mubr.f32.mxu0 0.0
      %1495 = vmatmul.mubr.f32.gmra.mrb[0].mxu0 %v1383
      %v1496 = vpop.f32.mrb[0].mxu0
      %v1497 = vadd.f32 %v1323, %v1496
      %v1498 = vpop.f32.mrb[0].mxu0
      %1499 = vmatprep.mubr.f32.mxu0 0.0
      %1500 = vmatmul.mubr.f32.gmra.mrb[0].mxu0 %v1385
      %v1501 = vpop.f32.mrb[0].mxu0
      %v1502 = vadd.f32 %v1323, %v1501
      %v1503 = vpop.f32.mrb[0].mxu0
      %1504 = vmatprep.mubr.f32.mxu0 0.0
      %1505 = vmatmul.mubr.f32.gmra.mrb[0].mxu0 %v1387
      %v1506 = vpop.f32.mrb[0].mxu0
      %v1507 = vadd.f32 %v1323, %v1506
      %v1508 = vpop.f32.mrb[0].mxu0
      %1509 = vmatprep.mubr.f32.mxu0 0.0
      %1510 = vmatmul.mubr.f32.gmra.mrb[0].mxu0 %v1389
      %v1511 = vpop.f32.mrb[0].mxu0
      %v1512 = vadd.f32 %v1323, %v1511
      %v1513 = vpop.f32.mrb[0].mxu0
      %1514 = vmatprep.mubr.f32.mxu0 0.0
      %1515 = vmatmul.mubr.f32.gmra.mrb[0].mxu0 %v1391
      %v1516 = vpop.f32.mrb[0].mxu0
      %v1517 = vadd.f32 %v1323, %v1516
      %v1518 = vpop.f32.mrb[0].mxu0
      %1519 = vmatprep.mubr.f32.mxu0 0.0
      %1520 = vmatmul.mubr.f32.gmra.mrb[0].mxu0 %v1393
      %v1521 = vpop.f32.mrb[0].mxu0
      %v1522 = vadd.f32 %v1323, %v1521
      %v1523 = vpop.f32.mrb[0].mxu0
      %1524 = vmatprep.mubr.f32.mxu0 0.0
      %1525 = vmatmul.mubr.f32.gmra.mrb[0].mxu0 %v1395
      %v1526 = vpop.f32.mrb[0].mxu0
      %v1527 = vadd.f32 %v1323, %v1526
      %v1528 = vpop.f32.mrb[0].mxu0
      %1529 = vmatprep.mubr.f32.mxu0 0.0
      %1530 = vmatmul.mubr.f32.gmra.mrb[0].mxu0 %v1397
      %v1531 = vpop.f32.mrb[0].mxu0
      %v1532 = vadd.f32 %v1323, %v1531
      %v1533 = vpop.f32.mrb[0].mxu0
      %1534 = vmatprep.mubr.f32.mxu0 0.0
      %1535 = vmatmul.mubr.f32.gmra.mrb[0].mxu0 %v1399
      %v1536 = vpop.f32.mrb[0].mxu0
      %v1537 = vadd.f32 %v1323, %v1536
      %v1538 = vpop.f32.mrb[0].mxu0
      %1539 = vmatprep.mubr.f32.mxu0 0.0
      %1540 = vmatmul.mubr.f32.gmra.mrb[0].mxu0 %v1401
      %v1541 = vpop.f32.mrb[0].mxu0
      %v1542 = vadd.f32 %v1323, %v1541
      %v1543 = vpop.f32.mrb[0].mxu0
      %1544 = vmatprep.mubr.f32.mxu0 0.0
      %1545 = vmatmul.mubr.f32.gmra.mrb[0].mxu0 %v1403
      %v1546 = vpop.f32.mrb[0].mxu0
      %v1547 = vadd.f32 %v1323, %v1546
      %v1548 = vpop.f32.mrb[0].mxu0
      %1549 = vdwg.mxu0
      %vm1550 = vcmask 64512
      %1551 = vst.msk [vmem:[%s364] sm:$0xff] %vm1550, %v1472
      %1552 = vst.msk [vmem:[%s364 + $0x8] sm:$0xff] %vm1550, %v1477
      %1553 = vst.msk [vmem:[%s364 + $0x10] sm:$0xff] %vm1550, %v1482
      %1554 = vst.msk [vmem:[%s364 + $0x18] sm:$0xff] %vm1550, %v1487
      %1555 = vst.msk [vmem:[%s364 + $0x20] sm:$0xff] %vm1550, %v1492
      %1556 = vst.msk [vmem:[%s364 + $0x28] sm:$0xff] %vm1550, %v1497
      %1557 = vst.msk [vmem:[%s364 + $0x30] sm:$0xff] %vm1550, %v1502
      %1558 = vst.msk [vmem:[%s364 + $0x38] sm:$0xff] %vm1550, %v1507
      %1559 = vst.msk [vmem:[%s364 + $0x40] sm:$0xff] %vm1550, %v1512
      %1560 = vst.msk [vmem:[%s364 + $0x48] sm:$0xff] %vm1550, %v1517
      %1561 = vst.msk [vmem:[%s364 + $0x50] sm:$0xff] %vm1550, %v1522
      %1562 = vst.msk [vmem:[%s364 + $0x58] sm:$0xff] %vm1550, %v1527
      %1563 = vst.msk [vmem:[%s364 + $0x60] sm:$0xff] %vm1550, %v1532
      %1564 = vst.msk [vmem:[%s364 + $0x68] sm:$0xff] %vm1550, %v1537
      %1565 = vst.msk [vmem:[%s364 + $0x70] sm:$0xff] %vm1550, %v1542
      %1566 = vst.msk [vmem:[%s364 + $0x78] sm:$0xff] %vm1550, %v1547
      %1583 = vst.msk [vmem:[%s370] sm:$0xff] %vm702, %v1342
      %1584 = vst.msk [vmem:[%s370 + $0x8] sm:$0xff] %vm702, %v1344
      %1585 = vst.msk [vmem:[%s370 + $0x10] sm:$0xff] %vm702, %v1346
      %1586 = vst.msk [vmem:[%s370 + $0x18] sm:$0xff] %vm702, %v1348
      %1587 = vst.msk [vmem:[%s370 + $0x20] sm:$0xff] %vm702, %v1350
      %1588 = vst.msk [vmem:[%s370 + $0x28] sm:$0xff] %vm702, %v1352
      %1589 = vst.msk [vmem:[%s370 + $0x30] sm:$0xff] %vm702, %v1354
      %1590 = vst.msk [vmem:[%s370 + $0x38] sm:$0xff] %vm702, %v1356
      %1591 = vst.msk [vmem:[%s370 + $0x40] sm:$0xff] %vm702, %v1358
      %1592 = vst.msk [vmem:[%s370 + $0x48] sm:$0xff] %vm702, %v1360
      %1593 = vst.msk [vmem:[%s370 + $0x50] sm:$0xff] %vm702, %v1362
      %1594 = vst.msk [vmem:[%s370 + $0x58] sm:$0xff] %vm702, %v1364
      %1595 = vst.msk [vmem:[%s370 + $0x60] sm:$0xff] %vm702, %v1366
      %1596 = vst.msk [vmem:[%s370 + $0x68] sm:$0xff] %vm702, %v1368
      %1597 = vst.msk [vmem:[%s370 + $0x70] sm:$0xff] %vm702, %v1370
      %1598 = vst.msk [vmem:[%s370 + $0x78] sm:$0xff] %vm702, %v1372
      %s1599 = smul.u32 16, %s21
      %p1600 = scmp.lt.s32.totalorder %s1599, 31
      %s1601 = scalar_select %p1600, %s1599, 31
      %s1602 = smul.addr %s1601, 8
      %s1603 = scalar_lea.vmem %s8, %s1602
      %s1604 = smul.u32 16, %s21
      %p1605 = scmp.lt.s32.totalorder %s1604, 31
      %s1606 = scalar_select %p1605, %s1604, 31
      %s1607 = smul.addr %s1606, 8
      %s1608 = scalar_lea.vmem %s9, %s1607
      // Predicated region
      $region53: #{rnn_agent_rollout.1} parent=51 // pred_check
        %p1609 = pneg %p217
      $region54: #{rnn_agent_rollout.1} parent=51 // pred_check_branch
        %1611 = sbr.rel (%p1609) target = $region56
      $region55: #{rnn_agent_rollout.1} parent=51 // pred_region
        %s1612 = smul.u32 16, %s21
      $region56: #{rnn_agent_rollout.1} parent=51 // pred_fallthru
        _
      // Predicated region
      $region57: #{rnn_agent_rollout.1} parent=51 // pred_check
        %p1613 = pneg %p243
      $region58: #{rnn_agent_rollout.1} parent=51 // pred_check_branch
        %1615 = sbr.rel (%p1613) target = $region60
      $region59: #{rnn_agent_rollout.1} parent=51 // pred_region
        %s1616 = smul.u32 16, %s21
      $region60: #{rnn_agent_rollout.1} parent=51 // pred_fallthru
        _
    $region52: #{rnn_agent_rollout.1} parent=5 // pred_fallthru
      _
    %p1617 = scmp.le.s32.totalorder 2, %s16
    // Predicated region
    $region61: #{rnn_agent_rollout.1} parent=5 // pred_check
      %p1618 = pneg %p1617
    $region62: #{rnn_agent_rollout.1} parent=5 // pred_check_branch
      %1620 = sbr.rel (%p1618) target = $region64
    $region63: #{rnn_agent_rollout.1} parent=5 // pred_region
      %s1621 = ssub.s32 %s16, 2
      // Predicated region
      $region65: #{rnn_agent_rollout.1} parent=63 // pred_check
        %p1622 = pneg %p223
      $region66: #{rnn_agent_rollout.1} parent=63 // pred_check_branch
        %1624 = sbr.rel (%p1622) target = $region68
      $region67: #{rnn_agent_rollout.1} parent=63 // pred_region
        %s1625 = smul.u32 16, %s22
        %p1626 = scmp.lt.s32.totalorder %s1625, 31
        %s1627 = scalar_select %p1626, %s1625, 31
        %s1628 = smul.addr %s1627, 8
        %s1629 = scalar_lea.vmem %s8, %s1628
      $region68: #{rnn_agent_rollout.1} parent=63 // pred_fallthru
        _
      // Predicated region
      $region69: #{rnn_agent_rollout.1} parent=63 // pred_check
        %p1630 = pneg %p249
      $region70: #{rnn_agent_rollout.1} parent=63 // pred_check_branch
        %1632 = sbr.rel (%p1630) target = $region72
      $region71: #{rnn_agent_rollout.1} parent=63 // pred_region
        %s1633 = smul.u32 16, %s22
        %p1634 = scmp.lt.s32.totalorder %s1633, 31
        %s1635 = scalar_select %p1634, %s1633, 31
        %s1636 = smul.addr %s1635, 8
        %s1637 = scalar_lea.vmem %s9, %s1636
      $region72: #{rnn_agent_rollout.1} parent=63 // pred_fallthru
        _
    $region64: #{rnn_agent_rollout.1} parent=5 // pred_fallthru
      _
  $region6: #{rnn_agent_rollout.1} parent=0 // loop_footer
    %s20 = sadd.s32 1, %s16
  $region7: #{rnn_agent_rollout.1} parent=0 // loop_footer_branch
    %15 = sbr.rel target = $region3
  $region8: #{rnn_agent_rollout.1} parent=0 // loop_exit
    _

</llo_original>
